<compile_context>
chip_gen: v6e
topology: v6e:2x2x1
jax: 0.10.0
libtpu: 0.0.40
codegen_flags: <defaults>
</compile_context>

<pallas_src>
import functools

import jax
import jax.numpy as jnp
from jax.experimental import pallas as pl
from jax.experimental.pallas import tpu as pltpu

LN_EPS = 1e-5


def _round_up(x, m):
    return (x + m - 1) // m * m


def _ln_cf(x, gamma, beta):
    """LayerNorm over the channel (sublane) axis of a channel-first [C, tn] tile.

    Single-pass variance (E[x^2] - mu^2), clamped at 0 for numerical safety.
    """
    mu = jnp.mean(x, axis=0, keepdims=True)
    ex2 = jnp.mean(x * x, axis=0, keepdims=True)
    var = jnp.maximum(ex2 - mu * mu, 0.0)
    return (x - mu) * jax.lax.rsqrt(var + LN_EPS) * gamma + beta


def _disc3_kernel(rep_ref, pose_ref,
                  wp1_ref, wp2_ref, wd1p_ref, wf_ref, wd2_ref, wd3_ref,
                  c_ref, out_ref, *, bb):
    cdt = wf_ref.dtype                                  # MXU compute dtype (bf16 or f32)

    # Packed per-channel constants: channel axis on sublanes, one column each.
    g_p = c_ref[0:32, 0:1]                              # LN(32) gamma  (pose encoder)
    b_p = c_ref[0:32, 1:2]                              # LN(32) beta
    b_l1 = c_ref[0:64, 2:3]                             # fused bias into decoderB Linear(128,64)
    g_d1 = c_ref[0:64, 3:4]                             # LN(64) gamma
    b_d1 = c_ref[0:64, 4:5]                             # LN(64) beta
    g_d2 = c_ref[0:32, 5:6]                             # LN(32) gamma
    b_d2 = c_ref[0:32, 6:7]                             # LN(32) beta
    b_out = c_ref[0:1, 7:8]                             # final bias

    # Hoist weight loads out of the (unrolled) batch-fold loop.
    wp1 = wp1_ref[...]                                  # [32, 7]   f32
    wp2 = wp2_ref[...]                                  # [64, 32]  cdt
    wd1p = wd1p_ref[...]                                # [64, 64]  cdt
    wf = wf_ref[...]                                    # [64, 128] cdt
    wd2 = wd2_ref[...]                                  # [32, 64]  cdt
    wd3 = wd3_ref[...]                                  # [1, 32]   cdt

    for bi in range(bb):                                # static unroll over folded batch rows
        rep = rep_ref[bi].astype(cdt)                   # [128, tn] (no-op cast if rep is already cdt)
        pose = pose_ref[bi].astype(jnp.float32)         # [7, tn]

        # pose_encoder: Linear(7,32,no bias) -> LN(32) -> ReLU -> Linear(32,64)
        # (the Linear(32,64) bias is folded into b_l1 since it only feeds a
        #  bias-free Linear in decoderB).  K=7 matmul kept in f32 (tiny).
        h = jnp.dot(wp1, pose, preferred_element_type=jnp.float32)                 # [32, tn]
        h = jnp.maximum(_ln_cf(h, g_p, b_p), 0.0)
        hp = jnp.dot(wp2, h.astype(cdt), preferred_element_type=jnp.float32)       # [64, tn]

        # decoderB first layer with point_encoder and biases algebraically folded:
        #   cat([enc_rep, enc_pose]) @ Wd1
        #     == (Wpt @ Wd1r)^T @ rep + Wd1p^T @ (Wp2^T h) + (bpt@Wd1r + bp2@Wd1p)
        f = (jnp.dot(wf, rep, preferred_element_type=jnp.float32)
             + jnp.dot(wd1p, hp.astype(cdt), preferred_element_type=jnp.float32)
             + b_l1)                                                                # [64, tn]
        f = jnp.maximum(_ln_cf(f, g_d1, b_d1), 0.0)
        f = jnp.dot(wd2, f.astype(cdt), preferred_element_type=jnp.float32)         # [32, tn]
        f = jnp.maximum(_ln_cf(f, g_d2, b_d2), 0.0)
        out = jnp.dot(wd3, f.astype(cdt), preferred_element_type=jnp.float32) + b_out  # [1, tn]

        out_ref[bi] = out.astype(out_ref.dtype)         # lane-dense [1, tn] store


def prepare_params(params, compute_dtype=jnp.bfloat16):
    """Prefuse / transpose / cast the raw discriminator3 params for the kernel."""
    (wp1, g_p, b_p, wp2, bp2, wpt, bpt,
     wd1, g_d1, b_d1, wd2, g_d2, b_d2, wd3, b_out) = params

    wd1r, wd1p = wd1[:64], wd1[64:]          # split matches cat([enc_rep, enc_pose])
    wf = wpt @ wd1r                          # [128, 64] fused point_encoder . decoderB[0]
    b_l1 = bpt @ wd1r + bp2 @ wd1p           # [64] all biases feeding the bias-free Linear

    cdt = compute_dtype
    wp1T = jnp.asarray(wp1.T, jnp.float32)   # [32, 7]   keep tiny K=7 matmul in f32
    wp2T = wp2.T.astype(cdt)                 # [64, 32]
    wd1pT = wd1p.T.astype(cdt)               # [64, 64]
    wfT = wf.T.astype(cdt)                   # [64, 128]
    wd2T = wd2.T.astype(cdt)                 # [32, 64]
    wd3T = wd3.T.astype(cdt)                 # [1, 32]

    def col(v):
        v = jnp.asarray(v, jnp.float32).reshape(-1)
        return jnp.pad(v, (0, 64 - v.shape[0]))

    consts = jnp.stack([col(g_p), col(b_p), col(b_l1), col(g_d1), col(b_d1),
                        col(g_d2), col(b_d2), col(b_out)], axis=1)   # [64, 8] f32

    return (wp1T, wp2T, wd1pT, wfT, wd2T, wd3T, consts)


def discriminator3_pallas(representation, dense_pose, kparams, *, tn=2048,
                          max_batch_fold=8):
    """representation: [B,128,N] (f32 or bf16), dense_pose: [B,7,N] -> [B,1,N] f32.

    For best performance feed `representation` already in bf16 (have the
    backbone emit bf16); the kernel accepts either dtype without extra copies.
    """
    B, C, N = representation.shape
    assert C == 128 and dense_pose.shape == (B, 7, N)
    wp1T, wp2T, wd1pT, wfT, wd2T, wd3T, consts = kparams

    # Lane tile: multiple of 128, clamped to (rounded-up) N.  The ragged last
    # block (N % tn_eff != 0) is handled by Pallas partial-block masking -- no
    # wrapper-side pad / extra HBM round trip.
    tn_eff = max(128, min(_round_up(tn, 128), _round_up(N, 128)))
    # Small-N regime: fold several batch rows into one grid step so each step
    # still has enough DMA/compute to hide the ~0.35us fixed step overhead.
    bb = 1
    if tn_eff < tn:
        bb = max(1, min(B, tn // tn_eff, max_batch_fold))

    weight_args = (wp1T, wp2T, wd1pT, wfT, wd2T, wd3T, consts)

    def full_spec(a):
        return pl.BlockSpec(a.shape, lambda b, j: (0, 0))

    # Leave the VMEM limit at the compiler default unless a very large tile is
    # requested (rep + pose + out, double-buffered, plus weights).
    itemsize = jnp.dtype(representation.dtype).itemsize
    approx_vmem = 2 * bb * tn_eff * (C * itemsize + 7 * 4 + 4) + (64 << 10)
    vmem_limit = int(min(2 * approx_vmem, 100 << 20)) if approx_vmem > (12 << 20) else None

    out = pl.pallas_call(
        functools.partial(_disc3_kernel, bb=bb),
        out_shape=jax.ShapeDtypeStruct((B, 1, N), jnp.float32),
        grid_spec=pltpu.PrefetchScalarGridSpec(
            num_scalar_prefetch=0,
            grid=(pl.cdiv(B, bb), pl.cdiv(N, tn_eff)),
            in_specs=[pl.BlockSpec((bb, C, tn_eff), lambda b, j: (b, 0, j)),
                      pl.BlockSpec((bb, 7, tn_eff), lambda b, j: (b, 0, j))]
                     + [full_spec(w) for w in weight_args],
            out_specs=pl.BlockSpec((bb, 1, tn_eff), lambda b, j: (b, 0, j)),
        ),
        compiler_params=pltpu.CompilerParams(
            dimension_semantics=("parallel", "parallel"),
            vmem_limit_bytes=vmem_limit),
    )(representation, dense_pose, *weight_args)

    return out


# ---------------------------------------------------------------------------
# Reference (pure JAX, channel-last like the PyTorch module) and test harness.
# ---------------------------------------------------------------------------

def init_params(key):
    ks = jax.random.split(key, 12)

    def lin(k, fi, fo):
        return jax.random.normal(k, (fi, fo), jnp.float32) / jnp.sqrt(fi)

    def aff(k, c):
        k1, k2 = jax.random.split(k)
        return (1.0 + 0.1 * jax.random.normal(k1, (c,), jnp.float32),
                0.1 * jax.random.normal(k2, (c,), jnp.float32))

    wp1 = lin(ks[0], 7, 32)                                  # pose_encoder Linear(7,32), no bias
    g_p, b_p = aff(ks[1], 32)                                # LayerNorm(32)
    wp2 = lin(ks[2], 32, 64)                                 # pose_encoder Linear(32,64)
    bp2 = 0.1 * jax.random.normal(ks[3], (64,), jnp.float32)
    wpt = lin(ks[4], 128, 64)                                # point_encoder Linear(128,64)
    bpt = 0.1 * jax.random.normal(ks[5], (64,), jnp.float32)
    wd1 = lin(ks[6], 128, 64)                                # decoderB Linear(128,64), no bias
    g_d1, b_d1 = aff(ks[7], 64)                              # LayerNorm(64)
    wd2 = lin(ks[8], 64, 32)                                 # decoderB Linear(64,32), no bias
    g_d2, b_d2 = aff(ks[9], 32)                              # LayerNorm(32)
    wd3 = lin(ks[10], 32, 1)                                 # decoderB Linear(32,1)
    b_out = 0.1 * jax.random.normal(ks[11], (1,), jnp.float32)
    return (wp1, g_p, b_p, wp2, bp2, wpt, bpt,
            wd1, g_d1, b_d1, wd2, g_d2, b_d2, wd3, b_out)


def reference_forward(representation, dense_pose, params):
    (wp1, g_p, b_p, wp2, bp2, wpt, bpt,
     wd1, g_d1, b_d1, wd2, g_d2, b_d2, wd3, b_out) = params
    B, C, N = representation.shape
    rep = jnp.transpose(representation, (0, 2, 1)).reshape(-1, C)
    pose = jnp.transpose(dense_pose, (0, 2, 1)).reshape(-1, 7)

    def ln(x, g, b):
        mu = x.mean(-1, keepdims=True)
        var = ((x - mu) ** 2).mean(-1, keepdims=True)
        return (x - mu) * jax.lax.rsqrt(var + LN_EPS) * g + b

    h = jnp.maximum(ln(pose @ wp1, g_p, b_p), 0.0)
    enc_pose = h @ wp2 + bp2
    enc_rep = rep @ wpt + bpt
    f = jnp.concatenate([enc_rep, enc_pose], axis=-1) @ wd1
    f = jnp.maximum(ln(f, g_d1, b_d1), 0.0)
    f = jnp.maximum(ln(f @ wd2, g_d2, b_d2), 0.0)
    out = f @ wd3 + b_out
    return jnp.transpose(out.reshape(B, N, 1), (0, 2, 1))


if __name__ == "__main__":
    key = jax.random.PRNGKey(0)
    kp, kr, kd, kr2, kd2 = jax.random.split(key, 5)
    B, N = 2, 256
    representation = jax.random.normal(kr, (B, 128, N), jnp.float32)
    dense_pose = jax.random.normal(kd, (B, 7, N), jnp.float32)
    params = init_params(kp)

    ref = reference_forward(representation, dense_pose, params)

    # f32 MXU path: tight check (only prefusion / ordering reassociation).
    out_f32 = discriminator3_pallas(representation, dense_pose,
                                    prepare_params(params, jnp.float32))
    out_f32 = jax.block_until_ready(out_f32)
    assert out_f32.shape == (B, 1, N)
    assert jnp.allclose(out_f32, ref, atol=1e-3, rtol=1e-3)

    # bf16 path: rep fed in bf16 (as the backbone would emit) + bf16 MXU weights
    # with f32 accumulation.  Looser tolerance for bf16 rounding.
    rep_bf16 = representation.astype(jnp.bfloat16)
    out_bf16 = discriminator3_pallas(rep_bf16, dense_pose,
                                     prepare_params(params, jnp.bfloat16))
    out_bf16 = jax.block_until_ready(out_bf16)
    assert jnp.allclose(out_bf16, ref, atol=1e-1, rtol=1e-1)

    # N not a multiple of the lane tile: exercised via Pallas partial-block
    # masking (no wrapper-side pad) + batch folding (bb=2 here).
    N2 = 200
    rep2, pose2 = representation[:, :, :N2], dense_pose[:, :, :N2]
    ref2 = reference_forward(rep2, pose2, params)
    out2 = discriminator3_pallas(rep2, pose2, prepare_params(params, jnp.float32))
    out2 = jax.block_until_ready(out2)
    assert out2.shape == (B, 1, N2)
    assert jnp.allclose(out2, ref2, atol=1e-3, rtol=1e-3)

    # Partial block on the batch axis too (B=3, batch fold capped at 2).
    B3 = 3
    rep3 = jax.random.normal(kr2, (B3, 128, N2), jnp.float32)
    pose3 = jax.random.normal(kd2, (B3, 7, N2), jnp.float32)
    ref3 = reference_forward(rep3, pose3, params)
    out3 = discriminator3_pallas(rep3, pose3, prepare_params(params, jnp.float32),
                                 max_batch_fold=2)
    out3 = jax.block_until_ready(out3)
    assert out3.shape == (B3, 1, N2)
    assert jnp.allclose(out3, ref3, atol=1e-3, rtol=1e-3)

    print("KERNEL_OK")
</pallas_src>

<mosaic_0001>
module attributes {stable_mosaic.version = 11 : i64} {
  func.func @_disc3_kernel(%arg0: i32, %arg1: i32, %arg2: memref<2x128x256xf32, #tpu.memory_space<vmem>>, %arg3: memref<2x7x256xf32, #tpu.memory_space<vmem>>, %arg4: memref<32x7xf32, #tpu.memory_space<vmem>>, %arg5: memref<64x32xf32, #tpu.memory_space<vmem>>, %arg6: memref<64x64xf32, #tpu.memory_space<vmem>>, %arg7: memref<64x128xf32, #tpu.memory_space<vmem>>, %arg8: memref<32x64xf32, #tpu.memory_space<vmem>>, %arg9: memref<1x32xf32, #tpu.memory_space<vmem>>, %arg10: memref<64x8xf32, #tpu.memory_space<vmem>>, %arg11: memref<2x1x256xf32, #tpu.memory_space<vmem>>) attributes {dimension_semantics = [#tpu.dimension_semantics<parallel>, #tpu.dimension_semantics<parallel>], iteration_bounds = array<i64: 1, 1>, scalar_prefetch = 0 : i64, scratch_operands = 0 : i64, tpu.core_type = #tpu.core_type<tc>, window_params = [{transform_indices = @transform_0, window_bounds = array<i64: 2, 128, 256>}, {transform_indices = @transform_1, window_bounds = array<i64: 2, 7, 256>}, {pipeline_mode = #tpu.pipeline_mode<synchronous>, transform_indices = @transform_2, window_bounds = array<i64: 32, 7>}, {pipeline_mode = #tpu.pipeline_mode<synchronous>, transform_indices = @transform_3, window_bounds = array<i64: 64, 32>}, {pipeline_mode = #tpu.pipeline_mode<synchronous>, transform_indices = @transform_4, window_bounds = array<i64: 64, 64>}, {pipeline_mode = #tpu.pipeline_mode<synchronous>, transform_indices = @transform_5, window_bounds = array<i64: 64, 128>}, {pipeline_mode = #tpu.pipeline_mode<synchronous>, transform_indices = @transform_6, window_bounds = array<i64: 32, 64>}, {pipeline_mode = #tpu.pipeline_mode<synchronous>, transform_indices = @transform_7, window_bounds = array<i64: 1, 32>}, {pipeline_mode = #tpu.pipeline_mode<synchronous>, transform_indices = @transform_8, window_bounds = array<i64: 64, 8>}, {transform_indices = @transform_9, window_bounds = array<i64: 2, 1, 256>}]} {
    %c0 = arith.constant 0 : index
    %c0_0 = arith.constant 0 : index
    %0 = vector.load %arg10[%c0, %c0_0] : memref<64x8xf32, #tpu.memory_space<vmem>>, vector<32x1xf32>
    %c0_1 = arith.constant 0 : index
    %c1 = arith.constant 1 : index
    %1 = vector.load %arg10[%c0_1, %c1] : memref<64x8xf32, #tpu.memory_space<vmem>>, vector<32x1xf32>
    %c0_2 = arith.constant 0 : index
    %c2 = arith.constant 2 : index
    %2 = vector.load %arg10[%c0_2, %c2] : memref<64x8xf32, #tpu.memory_space<vmem>>, vector<64x1xf32>
    %c0_3 = arith.constant 0 : index
    %c3 = arith.constant 3 : index
    %3 = vector.load %arg10[%c0_3, %c3] : memref<64x8xf32, #tpu.memory_space<vmem>>, vector<64x1xf32>
    %c0_4 = arith.constant 0 : index
    %c4 = arith.constant 4 : index
    %4 = vector.load %arg10[%c0_4, %c4] : memref<64x8xf32, #tpu.memory_space<vmem>>, vector<64x1xf32>
    %c0_5 = arith.constant 0 : index
    %c5 = arith.constant 5 : index
    %5 = vector.load %arg10[%c0_5, %c5] : memref<64x8xf32, #tpu.memory_space<vmem>>, vector<32x1xf32>
    %c0_6 = arith.constant 0 : index
    %c6 = arith.constant 6 : index
    %6 = vector.load %arg10[%c0_6, %c6] : memref<64x8xf32, #tpu.memory_space<vmem>>, vector<32x1xf32>
    %c0_7 = arith.constant 0 : index
    %c7 = arith.constant 7 : index
    %7 = vector.load %arg10[%c0_7, %c7] : memref<64x8xf32, #tpu.memory_space<vmem>>, vector<1x1xf32>
    %c0_8 = arith.constant 0 : index
    %c0_9 = arith.constant 0 : index
    %8 = vector.load %arg4[%c0_8, %c0_9] : memref<32x7xf32, #tpu.memory_space<vmem>>, vector<32x7xf32>
    %c0_10 = arith.constant 0 : index
    %c0_11 = arith.constant 0 : index
    %9 = vector.load %arg5[%c0_10, %c0_11] : memref<64x32xf32, #tpu.memory_space<vmem>>, vector<64x32xf32>
    %c0_12 = arith.constant 0 : index
    %c0_13 = arith.constant 0 : index
    %10 = vector.load %arg6[%c0_12, %c0_13] : memref<64x64xf32, #tpu.memory_space<vmem>>, vector<64x64xf32>
    %c0_14 = arith.constant 0 : index
    %c0_15 = arith.constant 0 : index
    %11 = vector.load %arg7[%c0_14, %c0_15] : memref<64x128xf32, #tpu.memory_space<vmem>>, vector<64x128xf32>
    %c0_16 = arith.constant 0 : index
    %c0_17 = arith.constant 0 : index
    %12 = vector.load %arg8[%c0_16, %c0_17] : memref<32x64xf32, #tpu.memory_space<vmem>>, vector<32x64xf32>
    %c0_18 = arith.constant 0 : index
    %c0_19 = arith.constant 0 : index
    %13 = vector.load %arg9[%c0_18, %c0_19] : memref<1x32xf32, #tpu.memory_space<vmem>>, vector<1x32xf32>
    %c0_20 = arith.constant 0 : index
    %c0_21 = arith.constant 0 : index
    %c0_22 = arith.constant 0 : index
    %14 = vector.load %arg2[%c0_20, %c0_21, %c0_22] : memref<2x128x256xf32, #tpu.memory_space<vmem>>, vector<1x128x256xf32>
    %15 = vector.shape_cast %14 : vector<1x128x256xf32> to vector<128x256xf32>
    %c0_23 = arith.constant 0 : index
    %c0_24 = arith.constant 0 : index
    %c0_25 = arith.constant 0 : index
    %16 = vector.load %arg3[%c0_23, %c0_24, %c0_25] : memref<2x7x256xf32, #tpu.memory_space<vmem>>, vector<1x7x256xf32>
    %17 = vector.shape_cast %16 : vector<1x7x256xf32> to vector<7x256xf32>
    %cst = arith.constant dense<0.000000e+00> : vector<32x256xf32>
    %18 = tpu.matmul %8, %17, %cst {dimension_numbers = #tpu.dot_dimension_numbers<[1], [0], [0], [1], [0, 0, 1, 1], [], []>} : vector<32x7xf32>, vector<7x256xf32>, vector<32x256xf32> -> vector<32x256xf32>
    %cst_26 = arith.constant dense<0.000000e+00> : vector<256xf32>
    %19 = vector.multi_reduction <add>, %18, %cst_26 [0] : vector<32x256xf32> to vector<256xf32>
    %20 = vector.shape_cast %19 : vector<256xf32> to vector<1x256xf32>
    %cst_27 = arith.constant 3.200000e+01 : f32
    %21 = vector.broadcast %cst_27 : f32 to vector<1x256xf32>
    %22 = arith.divf %20, %21 : vector<1x256xf32>
    %23 = arith.mulf %18, %18 : vector<32x256xf32>
    %cst_28 = arith.constant dense<0.000000e+00> : vector<256xf32>
    %24 = vector.multi_reduction <add>, %23, %cst_28 [0] : vector<32x256xf32> to vector<256xf32>
    %25 = vector.shape_cast %24 : vector<256xf32> to vector<1x256xf32>
    %cst_29 = arith.constant 3.200000e+01 : f32
    %26 = vector.broadcast %cst_29 : f32 to vector<1x256xf32>
    %27 = arith.divf %25, %26 : vector<1x256xf32>
    %28 = arith.mulf %22, %22 : vector<1x256xf32>
    %29 = arith.subf %27, %28 : vector<1x256xf32>
    %cst_30 = arith.constant 0.000000e+00 : f32
    %30 = vector.broadcast %cst_30 : f32 to vector<1x256xf32>
    %31 = arith.maximumf %29, %30 : vector<1x256xf32>
    %32 = vector.broadcast %22 : vector<1x256xf32> to vector<32x256xf32>
    %33 = arith.subf %18, %32 : vector<32x256xf32>
    %cst_31 = arith.constant 9.99999974E-6 : f32
    %34 = vector.broadcast %cst_31 : f32 to vector<1x256xf32>
    %35 = arith.addf %31, %34 : vector<1x256xf32>
    %36 = math.rsqrt %35 : vector<1x256xf32>
    %37 = vector.broadcast %36 : vector<1x256xf32> to vector<32x256xf32>
    %38 = arith.mulf %33, %37 : vector<32x256xf32>
    %39 = vector.broadcast %0 : vector<32x1xf32> to vector<32x256xf32>
    %40 = arith.mulf %38, %39 : vector<32x256xf32>
    %41 = vector.broadcast %1 : vector<32x1xf32> to vector<32x256xf32>
    %42 = arith.addf %40, %41 : vector<32x256xf32>
    %cst_32 = arith.constant 0.000000e+00 : f32
    %43 = vector.broadcast %cst_32 : f32 to vector<32x256xf32>
    %44 = arith.maximumf %42, %43 : vector<32x256xf32>
    %cst_33 = arith.constant dense<0.000000e+00> : vector<64x256xf32>
    %45 = tpu.matmul %9, %44, %cst_33 {dimension_numbers = #tpu.dot_dimension_numbers<[1], [0], [0], [1], [0, 0, 1, 1], [], []>} : vector<64x32xf32>, vector<32x256xf32>, vector<64x256xf32> -> vector<64x256xf32>
    %cst_34 = arith.constant dense<0.000000e+00> : vector<64x256xf32>
    %46 = tpu.matmul %11, %15, %cst_34 {dimension_numbers = #tpu.dot_dimension_numbers<[1], [0], [0], [1], [0, 0, 1, 1], [], []>} : vector<64x128xf32>, vector<128x256xf32>, vector<64x256xf32> -> vector<64x256xf32>
    %cst_35 = arith.constant dense<0.000000e+00> : vector<64x256xf32>
    %47 = tpu.matmul %10, %45, %cst_35 {dimension_numbers = #tpu.dot_dimension_numbers<[1], [0], [0], [1], [0, 0, 1, 1], [], []>} : vector<64x64xf32>, vector<64x256xf32>, vector<64x256xf32> -> vector<64x256xf32>
    %48 = arith.addf %46, %47 : vector<64x256xf32>
    %49 = vector.broadcast %2 : vector<64x1xf32> to vector<64x256xf32>
    %50 = arith.addf %48, %49 : vector<64x256xf32>
    %cst_36 = arith.constant dense<0.000000e+00> : vector<256xf32>
    %51 = vector.multi_reduction <add>, %50, %cst_36 [0] : vector<64x256xf32> to vector<256xf32>
    %52 = vector.shape_cast %51 : vector<256xf32> to vector<1x256xf32>
    %cst_37 = arith.constant 6.400000e+01 : f32
    %53 = vector.broadcast %cst_37 : f32 to vector<1x256xf32>
    %54 = arith.divf %52, %53 : vector<1x256xf32>
    %55 = arith.mulf %50, %50 : vector<64x256xf32>
    %cst_38 = arith.constant dense<0.000000e+00> : vector<256xf32>
    %56 = vector.multi_reduction <add>, %55, %cst_38 [0] : vector<64x256xf32> to vector<256xf32>
    %57 = vector.shape_cast %56 : vector<256xf32> to vector<1x256xf32>
    %cst_39 = arith.constant 6.400000e+01 : f32
    %58 = vector.broadcast %cst_39 : f32 to vector<1x256xf32>
    %59 = arith.divf %57, %58 : vector<1x256xf32>
    %60 = arith.mulf %54, %54 : vector<1x256xf32>
    %61 = arith.subf %59, %60 : vector<1x256xf32>
    %cst_40 = arith.constant 0.000000e+00 : f32
    %62 = vector.broadcast %cst_40 : f32 to vector<1x256xf32>
    %63 = arith.maximumf %61, %62 : vector<1x256xf32>
    %64 = vector.broadcast %54 : vector<1x256xf32> to vector<64x256xf32>
    %65 = arith.subf %50, %64 : vector<64x256xf32>
    %cst_41 = arith.constant 9.99999974E-6 : f32
    %66 = vector.broadcast %cst_41 : f32 to vector<1x256xf32>
    %67 = arith.addf %63, %66 : vector<1x256xf32>
    %68 = math.rsqrt %67 : vector<1x256xf32>
    %69 = vector.broadcast %68 : vector<1x256xf32> to vector<64x256xf32>
    %70 = arith.mulf %65, %69 : vector<64x256xf32>
    %71 = vector.broadcast %3 : vector<64x1xf32> to vector<64x256xf32>
    %72 = arith.mulf %70, %71 : vector<64x256xf32>
    %73 = vector.broadcast %4 : vector<64x1xf32> to vector<64x256xf32>
    %74 = arith.addf %72, %73 : vector<64x256xf32>
    %cst_42 = arith.constant 0.000000e+00 : f32
    %75 = vector.broadcast %cst_42 : f32 to vector<64x256xf32>
    %76 = arith.maximumf %74, %75 : vector<64x256xf32>
    %cst_43 = arith.constant dense<0.000000e+00> : vector<32x256xf32>
    %77 = tpu.matmul %12, %76, %cst_43 {dimension_numbers = #tpu.dot_dimension_numbers<[1], [0], [0], [1], [0, 0, 1, 1], [], []>} : vector<32x64xf32>, vector<64x256xf32>, vector<32x256xf32> -> vector<32x256xf32>
    %cst_44 = arith.constant dense<0.000000e+00> : vector<256xf32>
    %78 = vector.multi_reduction <add>, %77, %cst_44 [0] : vector<32x256xf32> to vector<256xf32>
    %79 = vector.shape_cast %78 : vector<256xf32> to vector<1x256xf32>
    %cst_45 = arith.constant 3.200000e+01 : f32
    %80 = vector.broadcast %cst_45 : f32 to vector<1x256xf32>
    %81 = arith.divf %79, %80 : vector<1x256xf32>
    %82 = arith.mulf %77, %77 : vector<32x256xf32>
    %cst_46 = arith.constant dense<0.000000e+00> : vector<256xf32>
    %83 = vector.multi_reduction <add>, %82, %cst_46 [0] : vector<32x256xf32> to vector<256xf32>
    %84 = vector.shape_cast %83 : vector<256xf32> to vector<1x256xf32>
    %cst_47 = arith.constant 3.200000e+01 : f32
    %85 = vector.broadcast %cst_47 : f32 to vector<1x256xf32>
    %86 = arith.divf %84, %85 : vector<1x256xf32>
    %87 = arith.mulf %81, %81 : vector<1x256xf32>
    %88 = arith.subf %86, %87 : vector<1x256xf32>
    %cst_48 = arith.constant 0.000000e+00 : f32
    %89 = vector.broadcast %cst_48 : f32 to vector<1x256xf32>
    %90 = arith.maximumf %88, %89 : vector<1x256xf32>
    %91 = vector.broadcast %81 : vector<1x256xf32> to vector<32x256xf32>
    %92 = arith.subf %77, %91 : vector<32x256xf32>
    %cst_49 = arith.constant 9.99999974E-6 : f32
    %93 = vector.broadcast %cst_49 : f32 to vector<1x256xf32>
    %94 = arith.addf %90, %93 : vector<1x256xf32>
    %95 = math.rsqrt %94 : vector<1x256xf32>
    %96 = vector.broadcast %95 : vector<1x256xf32> to vector<32x256xf32>
    %97 = arith.mulf %92, %96 : vector<32x256xf32>
    %98 = vector.broadcast %5 : vector<32x1xf32> to vector<32x256xf32>
    %99 = arith.mulf %97, %98 : vector<32x256xf32>
    %100 = vector.broadcast %6 : vector<32x1xf32> to vector<32x256xf32>
    %101 = arith.addf %99, %100 : vector<32x256xf32>
    %cst_50 = arith.constant 0.000000e+00 : f32
    %102 = vector.broadcast %cst_50 : f32 to vector<32x256xf32>
    %103 = arith.maximumf %101, %102 : vector<32x256xf32>
    %cst_51 = arith.constant dense<0.000000e+00> : vector<1x256xf32>
    %104 = tpu.matmul %13, %103, %cst_51 {dimension_numbers = #tpu.dot_dimension_numbers<[1], [0], [0], [1], [0, 0, 1, 1], [], []>} : vector<1x32xf32>, vector<32x256xf32>, vector<1x256xf32> -> vector<1x256xf32>
    %105 = vector.broadcast %7 : vector<1x1xf32> to vector<1x256xf32>
    %106 = arith.addf %104, %105 : vector<1x256xf32>
    %c0_52 = arith.constant 0 : index
    %c0_53 = arith.constant 0 : index
    %c0_54 = arith.constant 0 : index
    %107 = vector.load %arg11[%c0_52, %c0_53, %c0_54] : memref<2x1x256xf32, #tpu.memory_space<vmem>>, vector<1x1x256xf32>
    %108 = vector.shape_cast %107 : vector<1x1x256xf32> to vector<1x256xf32>
    %109 = vector.shape_cast %106 : vector<1x256xf32> to vector<1x1x256xf32>
    tpu.vector_store %arg11[%c0_52, %c0_53, %c0_54], %109 {strides = array<i32>} : memref<2x1x256xf32, #tpu.memory_space<vmem>>, vector<1x1x256xf32>,
    %c1_55 = arith.constant 1 : index
    %c0_56 = arith.constant 0 : index
    %c0_57 = arith.constant 0 : index
    %110 = vector.load %arg2[%c1_55, %c0_56, %c0_57] : memref<2x128x256xf32, #tpu.memory_space<vmem>>, vector<1x128x256xf32>
    %111 = vector.shape_cast %110 : vector<1x128x256xf32> to vector<128x256xf32>
    %c1_58 = arith.constant 1 : index
    %c0_59 = arith.constant 0 : index
    %c0_60 = arith.constant 0 : index
    %112 = vector.load %arg3[%c1_58, %c0_59, %c0_60] : memref<2x7x256xf32, #tpu.memory_space<vmem>>, vector<1x7x256xf32>
    %113 = vector.shape_cast %112 : vector<1x7x256xf32> to vector<7x256xf32>
    %cst_61 = arith.constant dense<0.000000e+00> : vector<32x256xf32>
    %114 = tpu.matmul %8, %113, %cst_61 {dimension_numbers = #tpu.dot_dimension_numbers<[1], [0], [0], [1], [0, 0, 1, 1], [], []>} : vector<32x7xf32>, vector<7x256xf32>, vector<32x256xf32> -> vector<32x256xf32>
    %cst_62 = arith.constant dense<0.000000e+00> : vector<256xf32>
    %115 = vector.multi_reduction <add>, %114, %cst_62 [0] : vector<32x256xf32> to vector<256xf32>
    %116 = vector.shape_cast %115 : vector<256xf32> to vector<1x256xf32>
    %cst_63 = arith.constant 3.200000e+01 : f32
    %117 = vector.broadcast %cst_63 : f32 to vector<1x256xf32>
    %118 = arith.divf %116, %117 : vector<1x256xf32>
    %119 = arith.mulf %114, %114 : vector<32x256xf32>
    %cst_64 = arith.constant dense<0.000000e+00> : vector<256xf32>
    %120 = vector.multi_reduction <add>, %119, %cst_64 [0] : vector<32x256xf32> to vector<256xf32>
    %121 = vector.shape_cast %120 : vector<256xf32> to vector<1x256xf32>
    %cst_65 = arith.constant 3.200000e+01 : f32
    %122 = vector.broadcast %cst_65 : f32 to vector<1x256xf32>
    %123 = arith.divf %121, %122 : vector<1x256xf32>
    %124 = arith.mulf %118, %118 : vector<1x256xf32>
    %125 = arith.subf %123, %124 : vector<1x256xf32>
    %cst_66 = arith.constant 0.000000e+00 : f32
    %126 = vector.broadcast %cst_66 : f32 to vector<1x256xf32>
    %127 = arith.maximumf %125, %126 : vector<1x256xf32>
    %128 = vector.broadcast %118 : vector<1x256xf32> to vector<32x256xf32>
    %129 = arith.subf %114, %128 : vector<32x256xf32>
    %cst_67 = arith.constant 9.99999974E-6 : f32
    %130 = vector.broadcast %cst_67 : f32 to vector<1x256xf32>
    %131 = arith.addf %127, %130 : vector<1x256xf32>
    %132 = math.rsqrt %131 : vector<1x256xf32>
    %133 = vector.broadcast %132 : vector<1x256xf32> to vector<32x256xf32>
    %134 = arith.mulf %129, %133 : vector<32x256xf32>
    %135 = vector.broadcast %0 : vector<32x1xf32> to vector<32x256xf32>
    %136 = arith.mulf %134, %135 : vector<32x256xf32>
    %137 = vector.broadcast %1 : vector<32x1xf32> to vector<32x256xf32>
    %138 = arith.addf %136, %137 : vector<32x256xf32>
    %cst_68 = arith.constant 0.000000e+00 : f32
    %139 = vector.broadcast %cst_68 : f32 to vector<32x256xf32>
    %140 = arith.maximumf %138, %139 : vector<32x256xf32>
    %cst_69 = arith.constant dense<0.000000e+00> : vector<64x256xf32>
    %141 = tpu.matmul %9, %140, %cst_69 {dimension_numbers = #tpu.dot_dimension_numbers<[1], [0], [0], [1], [0, 0, 1, 1], [], []>} : vector<64x32xf32>, vector<32x256xf32>, vector<64x256xf32> -> vector<64x256xf32>
    %cst_70 = arith.constant dense<0.000000e+00> : vector<64x256xf32>
    %142 = tpu.matmul %11, %111, %cst_70 {dimension_numbers = #tpu.dot_dimension_numbers<[1], [0], [0], [1], [0, 0, 1, 1], [], []>} : vector<64x128xf32>, vector<128x256xf32>, vector<64x256xf32> -> vector<64x256xf32>
    %cst_71 = arith.constant dense<0.000000e+00> : vector<64x256xf32>
    %143 = tpu.matmul %10, %141, %cst_71 {dimension_numbers = #tpu.dot_dimension_numbers<[1], [0], [0], [1], [0, 0, 1, 1], [], []>} : vector<64x64xf32>, vector<64x256xf32>, vector<64x256xf32> -> vector<64x256xf32>
    %144 = arith.addf %142, %143 : vector<64x256xf32>
    %145 = vector.broadcast %2 : vector<64x1xf32> to vector<64x256xf32>
    %146 = arith.addf %144, %145 : vector<64x256xf32>
    %cst_72 = arith.constant dense<0.000000e+00> : vector<256xf32>
    %147 = vector.multi_reduction <add>, %146, %cst_72 [0] : vector<64x256xf32> to vector<256xf32>
    %148 = vector.shape_cast %147 : vector<256xf32> to vector<1x256xf32>
    %cst_73 = arith.constant 6.400000e+01 : f32
    %149 = vector.broadcast %cst_73 : f32 to vector<1x256xf32>
    %150 = arith.divf %148, %149 : vector<1x256xf32>
    %151 = arith.mulf %146, %146 : vector<64x256xf32>
    %cst_74 = arith.constant dense<0.000000e+00> : vector<256xf32>
    %152 = vector.multi_reduction <add>, %151, %cst_74 [0] : vector<64x256xf32> to vector<256xf32>
    %153 = vector.shape_cast %152 : vector<256xf32> to vector<1x256xf32>
    %cst_75 = arith.constant 6.400000e+01 : f32
    %154 = vector.broadcast %cst_75 : f32 to vector<1x256xf32>
    %155 = arith.divf %153, %154 : vector<1x256xf32>
    %156 = arith.mulf %150, %150 : vector<1x256xf32>
    %157 = arith.subf %155, %156 : vector<1x256xf32>
    %cst_76 = arith.constant 0.000000e+00 : f32
    %158 = vector.broadcast %cst_76 : f32 to vector<1x256xf32>
    %159 = arith.maximumf %157, %158 : vector<1x256xf32>
    %160 = vector.broadcast %150 : vector<1x256xf32> to vector<64x256xf32>
    %161 = arith.subf %146, %160 : vector<64x256xf32>
    %cst_77 = arith.constant 9.99999974E-6 : f32
    %162 = vector.broadcast %cst_77 : f32 to vector<1x256xf32>
    %163 = arith.addf %159, %162 : vector<1x256xf32>
    %164 = math.rsqrt %163 : vector<1x256xf32>
    %165 = vector.broadcast %164 : vector<1x256xf32> to vector<64x256xf32>
    %166 = arith.mulf %161, %165 : vector<64x256xf32>
    %167 = vector.broadcast %3 : vector<64x1xf32> to vector<64x256xf32>
    %168 = arith.mulf %166, %167 : vector<64x256xf32>
    %169 = vector.broadcast %4 : vector<64x1xf32> to vector<64x256xf32>
    %170 = arith.addf %168, %169 : vector<64x256xf32>
    %cst_78 = arith.constant 0.000000e+00 : f32
    %171 = vector.broadcast %cst_78 : f32 to vector<64x256xf32>
    %172 = arith.maximumf %170, %171 : vector<64x256xf32>
    %cst_79 = arith.constant dense<0.000000e+00> : vector<32x256xf32>
    %173 = tpu.matmul %12, %172, %cst_79 {dimension_numbers = #tpu.dot_dimension_numbers<[1], [0], [0], [1], [0, 0, 1, 1], [], []>} : vector<32x64xf32>, vector<64x256xf32>, vector<32x256xf32> -> vector<32x256xf32>
    %cst_80 = arith.constant dense<0.000000e+00> : vector<256xf32>
    %174 = vector.multi_reduction <add>, %173, %cst_80 [0] : vector<32x256xf32> to vector<256xf32>
    %175 = vector.shape_cast %174 : vector<256xf32> to vector<1x256xf32>
    %cst_81 = arith.constant 3.200000e+01 : f32
    %176 = vector.broadcast %cst_81 : f32 to vector<1x256xf32>
    %177 = arith.divf %175, %176 : vector<1x256xf32>
    %178 = arith.mulf %173, %173 : vector<32x256xf32>
    %cst_82 = arith.constant dense<0.000000e+00> : vector<256xf32>
    %179 = vector.multi_reduction <add>, %178, %cst_82 [0] : vector<32x256xf32> to vector<256xf32>
    %180 = vector.shape_cast %179 : vector<256xf32> to vector<1x256xf32>
    %cst_83 = arith.constant 3.200000e+01 : f32
    %181 = vector.broadcast %cst_83 : f32 to vector<1x256xf32>
    %182 = arith.divf %180, %181 : vector<1x256xf32>
    %183 = arith.mulf %177, %177 : vector<1x256xf32>
    %184 = arith.subf %182, %183 : vector<1x256xf32>
    %cst_84 = arith.constant 0.000000e+00 : f32
    %185 = vector.broadcast %cst_84 : f32 to vector<1x256xf32>
    %186 = arith.maximumf %184, %185 : vector<1x256xf32>
    %187 = vector.broadcast %177 : vector<1x256xf32> to vector<32x256xf32>
    %188 = arith.subf %173, %187 : vector<32x256xf32>
    %cst_85 = arith.constant 9.99999974E-6 : f32
    %189 = vector.broadcast %cst_85 : f32 to vector<1x256xf32>
    %190 = arith.addf %186, %189 : vector<1x256xf32>
    %191 = math.rsqrt %190 : vector<1x256xf32>
    %192 = vector.broadcast %191 : vector<1x256xf32> to vector<32x256xf32>
    %193 = arith.mulf %188, %192 : vector<32x256xf32>
    %194 = vector.broadcast %5 : vector<32x1xf32> to vector<32x256xf32>
    %195 = arith.mulf %193, %194 : vector<32x256xf32>
    %196 = vector.broadcast %6 : vector<32x1xf32> to vector<32x256xf32>
    %197 = arith.addf %195, %196 : vector<32x256xf32>
    %cst_86 = arith.constant 0.000000e+00 : f32
    %198 = vector.broadcast %cst_86 : f32 to vector<32x256xf32>
    %199 = arith.maximumf %197, %198 : vector<32x256xf32>
    %cst_87 = arith.constant dense<0.000000e+00> : vector<1x256xf32>
    %200 = tpu.matmul %13, %199, %cst_87 {dimension_numbers = #tpu.dot_dimension_numbers<[1], [0], [0], [1], [0, 0, 1, 1], [], []>} : vector<1x32xf32>, vector<32x256xf32>, vector<1x256xf32> -> vector<1x256xf32>
    %201 = vector.broadcast %7 : vector<1x1xf32> to vector<1x256xf32>
    %202 = arith.addf %200, %201 : vector<1x256xf32>
    %c1_88 = arith.constant 1 : index
    %c0_89 = arith.constant 0 : index
    %c0_90 = arith.constant 0 : index
    %203 = vector.load %arg11[%c1_88, %c0_89, %c0_90] : memref<2x1x256xf32, #tpu.memory_space<vmem>>, vector<1x1x256xf32>
    %204 = vector.shape_cast %203 : vector<1x1x256xf32> to vector<1x256xf32>
    %205 = vector.shape_cast %202 : vector<1x256xf32> to vector<1x1x256xf32>
    tpu.vector_store %arg11[%c1_88, %c0_89, %c0_90], %205 {strides = array<i32>} : memref<2x1x256xf32, #tpu.memory_space<vmem>>, vector<1x1x256xf32>,
    return
  }
  func.func @transform_0(%arg0: i32, %arg1: i32) -> (i32, i32, i32) {
    %c0_i32 = arith.constant 0 : i32
    %c0_i32_0 = arith.constant 0 : i32
    return %arg0, %c0_i32, %arg1 : i32, i32, i32
  }
  func.func @transform_1(%arg0: i32, %arg1: i32) -> (i32, i32, i32) {
    %c0_i32 = arith.constant 0 : i32
    %c0_i32_0 = arith.constant 0 : i32
    return %arg0, %c0_i32, %arg1 : i32, i32, i32
  }
  func.func @transform_2(%arg0: i32, %arg1: i32) -> (i32, i32) {
    %c0_i32 = arith.constant 0 : i32
    %c0_i32_0 = arith.constant 0 : i32
    %c0_i32_1 = arith.constant 0 : i32
    return %c0_i32, %c0_i32_0 : i32, i32
  }
  func.func @transform_3(%arg0: i32, %arg1: i32) -> (i32, i32) {
    %c0_i32 = arith.constant 0 : i32
    %c0_i32_0 = arith.constant 0 : i32
    %c0_i32_1 = arith.constant 0 : i32
    return %c0_i32, %c0_i32_0 : i32, i32
  }
  func.func @transform_4(%arg0: i32, %arg1: i32) -> (i32, i32) {
    %c0_i32 = arith.constant 0 : i32
    %c0_i32_0 = arith.constant 0 : i32
    %c0_i32_1 = arith.constant 0 : i32
    return %c0_i32, %c0_i32_0 : i32, i32
  }
  func.func @transform_5(%arg0: i32, %arg1: i32) -> (i32, i32) {
    %c0_i32 = arith.constant 0 : i32
    %c0_i32_0 = arith.constant 0 : i32
    %c0_i32_1 = arith.constant 0 : i32
    return %c0_i32, %c0_i32_0 : i32, i32
  }
  func.func @transform_6(%arg0: i32, %arg1: i32) -> (i32, i32) {
    %c0_i32 = arith.constant 0 : i32
    %c0_i32_0 = arith.constant 0 : i32
    %c0_i32_1 = arith.constant 0 : i32
    return %c0_i32, %c0_i32_0 : i32, i32
  }
  func.func @transform_7(%arg0: i32, %arg1: i32) -> (i32, i32) {
    %c0_i32 = arith.constant 0 : i32
    %c0_i32_0 = arith.constant 0 : i32
    %c0_i32_1 = arith.constant 0 : i32
    return %c0_i32, %c0_i32_0 : i32, i32
  }
  func.func @transform_8(%arg0: i32, %arg1: i32) -> (i32, i32) {
    %c0_i32 = arith.constant 0 : i32
    %c0_i32_0 = arith.constant 0 : i32
    %c0_i32_1 = arith.constant 0 : i32
    return %c0_i32, %c0_i32_0 : i32, i32
  }
  func.func @transform_9(%arg0: i32, %arg1: i32) -> (i32, i32, i32) {
    %c0_i32 = arith.constant 0 : i32
    %c0_i32_0 = arith.constant 0 : i32
    return %arg0, %c0_i32, %arg1 : i32, i32, i32
  }
}

</mosaic_0001>

<llo_original>
// kernel: tpu_custom_call.1
$region0: #{tpu_custom_call.1}
  #allocation0 [shape = 'u32[]', space=smem, size = 0x4, offset = 0x4, fixed_abs, tag = 'smem constant byte address 0x4 - core index']
  #allocation1 [shape = 'u32[144,128]{1,0:T(1,128)}', space=vmem, size = 0x12000, scoped, tag = 'internal scratch']
  %s0 = inlined_call_operand.hbm [shape: f32[2,128,256], index: 0, kind: input, shape index: {}]
  %s1 = inlined_call_operand.vmem [shape: f32[2,7,256], index: 1, kind: input, shape index: {}]
  %s2 = inlined_call_operand.vmem [shape: f32[32,7], index: 2, kind: input, shape index: {}]
  %s3 = inlined_call_operand.vmem [shape: f32[64,32], index: 3, kind: input, shape index: {}]
  %s4 = inlined_call_operand.vmem [shape: f32[64,64], index: 4, kind: input, shape index: {}]
  %s5 = inlined_call_operand.vmem [shape: f32[64,128], index: 5, kind: input, shape index: {}]
  %s6 = inlined_call_operand.vmem [shape: f32[32,64], index: 6, kind: input, shape index: {}]
  %s7 = inlined_call_operand.vmem [shape: f32[1,32], index: 7, kind: input, shape index: {}]
  %s8 = inlined_call_operand.vmem [shape: f32[64,8], index: 8, kind: input, shape index: {}]
  %s9 = inlined_call_operand.hbm [shape: f32[2,1,256], index: 9, kind: output, shape index: {}]
  %s10 = sld [smem:[#allocation0]]
  $region50: #{tpu_custom_call.1} parent=0
    _
  %s12 = ssub.s32 1, %s10
  %s13 = scalar_select 0, %s12, %s10
  $region1: #{tpu_custom_call.1} parent=0
    #allocation2 [shape = 'u8[262144]{0}', space=vmem, size = 0x40000, scoped, tag = 'input window, operand 0, single buffered']
    #allocation3 [shape = 's32[1]{0}', space=sflag, size = 0x4, scoped, tag = 'scoped memory for tpu_custom_call.1']
    #allocation4 [shape = 's32[1]{0}', space=sflag, size = 0x4, scoped, tag = 'scoped memory for tpu_custom_call.1']
    #allocation5 [shape = 'u8[2048]{0}', space=vmem, size = 0x800, scoped, tag = 'output window, operand 0, single buffered']
    %14 = vsyncpa [#allocation3], 0
    %15 = vsyncpa [#allocation4], 0
    // Predicated region
    $region2: #{tpu_custom_call.1} parent=1 // pred_check
      _
    $region3: #{tpu_custom_call.1} parent=1 // pred_check_branch
      %17 = sbr.rel (0) target = $region5
    $region4: #{tpu_custom_call.1} parent=1 // pred_region
      %s19 = ssub.s32 8192, 8192
      %20 = vsyncadd [#allocation3], %s19
      %s21 = sshll.u32 [#allocation2], 4
      %s22 = int_to_ptr.vmem [resolvable:$true] %s21
      %27 = dma.hbm_to_vmem [thread:$0]  %s0, 8192, %s22, [#allocation3], 256, 256, 16
    $region5: #{tpu_custom_call.1} parent=1 // pred_fallthru
      _
    // Predicated region
    $region6: #{tpu_custom_call.1} parent=1 // pred_check
      _
    $region7: #{tpu_custom_call.1} parent=1 // pred_check_branch
      %29 = sbr.rel (0) target = $region9
    $region8: #{tpu_custom_call.1} parent=1 // pred_region
      _
    $region9: #{tpu_custom_call.1} parent=1 // pred_fallthru
      _
    // Predicated region
    $region10: #{tpu_custom_call.1} parent=1 // pred_check
      _
    $region11: #{tpu_custom_call.1} parent=1 // pred_check_branch
      %31 = sbr.rel (0) target = $region13
    $region12: #{tpu_custom_call.1} parent=1 // pred_region
      _
    $region13: #{tpu_custom_call.1} parent=1 // pred_fallthru
      _
    // Predicated region
    $region14: #{tpu_custom_call.1} parent=1 // pred_check
      _
    $region15: #{tpu_custom_call.1} parent=1 // pred_check_branch
      %33 = sbr.rel (0) target = $region17
    $region16: #{tpu_custom_call.1} parent=1 // pred_region
      _
    $region17: #{tpu_custom_call.1} parent=1 // pred_fallthru
      _
    // Predicated region
    $region18: #{tpu_custom_call.1} parent=1 // pred_check
      _
    $region19: #{tpu_custom_call.1} parent=1 // pred_check_branch
      %35 = sbr.rel (0) target = $region21
    $region20: #{tpu_custom_call.1} parent=1 // pred_region
      _
    $region21: #{tpu_custom_call.1} parent=1 // pred_fallthru
      _
    // Predicated region
    $region22: #{tpu_custom_call.1} parent=1 // pred_check
      _
    $region23: #{tpu_custom_call.1} parent=1 // pred_check_branch
      %37 = sbr.rel (0) target = $region25
    $region24: #{tpu_custom_call.1} parent=1 // pred_region
      _
    $region25: #{tpu_custom_call.1} parent=1 // pred_fallthru
      _
    // Predicated region
    $region26: #{tpu_custom_call.1} parent=1 // pred_check
      _
    $region27: #{tpu_custom_call.1} parent=1 // pred_check_branch
      %39 = sbr.rel (0) target = $region29
    $region28: #{tpu_custom_call.1} parent=1 // pred_region
      _
    $region29: #{tpu_custom_call.1} parent=1 // pred_fallthru
      _
    // Predicated region
    $region30: #{tpu_custom_call.1} parent=1 // pred_check
      _
    $region31: #{tpu_custom_call.1} parent=1 // pred_check_branch
      %41 = sbr.rel (0) target = $region33
    $region32: #{tpu_custom_call.1} parent=1 // pred_region
      _
    $region33: #{tpu_custom_call.1} parent=1 // pred_fallthru
      _
    // Predicated region
    $region34: #{tpu_custom_call.1} parent=1 // pred_check
      _
    $region35: #{tpu_custom_call.1} parent=1 // pred_check_branch
      %43 = sbr.rel (0) target = $region37
    $region36: #{tpu_custom_call.1} parent=1 // pred_region
      _
    $region37: #{tpu_custom_call.1} parent=1 // pred_fallthru
      _
    // Predicated region
    $region38: #{tpu_custom_call.1} parent=1 // pred_check
      _
    $region39: #{tpu_custom_call.1} parent=1 // pred_check_branch
      %45 = sbr.rel (0) target = $region41
    $region40: #{tpu_custom_call.1} parent=1 // pred_region
      %46 = dma.done [#allocation3], 8192
    $region41: #{tpu_custom_call.1} parent=1 // pred_fallthru
      _
    %v47 = vld [vmem:[%s8] sm:$0xff]
    %v48 = vld [vmem:[%s8 + $0x8] sm:$0xff]
    %v49 = vld [vmem:[%s8 + $0x10] sm:$0xff]
    %v50 = vld [vmem:[%s8 + $0x18] sm:$0xff]
    %v51 = vld [vmem:[%s8 + $0x20] sm:$0xff]
    %v52 = vld [vmem:[%s8 + $0x28] sm:$0xff]
    %v53 = vld [vmem:[%s8 + $0x30] sm:$0xff]
    %v54 = vld [vmem:[%s8 + $0x38] sm:$0xff]
    %v55 = vld [vmem:[%s8] sm:$0x1]
    %v56 = vld [vmem:[%s2] sm:$0xff]
    %v57 = vld [vmem:[%s2 + $0x8] sm:$0xff]
    %v58 = vld [vmem:[%s2 + $0x10] sm:$0xff]
    %v59 = vld [vmem:[%s2 + $0x18] sm:$0xff]
    %v60 = vld [vmem:[%s3] sm:$0xff]
    %v61 = vld [vmem:[%s3 + $0x8] sm:$0xff]
    %v62 = vld [vmem:[%s3 + $0x10] sm:$0xff]
    %v63 = vld [vmem:[%s3 + $0x18] sm:$0xff]
    %v64 = vld [vmem:[%s3 + $0x20] sm:$0xff]
    %v65 = vld [vmem:[%s3 + $0x28] sm:$0xff]
    %v66 = vld [vmem:[%s3 + $0x30] sm:$0xff]
    %v67 = vld [vmem:[%s3 + $0x38] sm:$0xff]
    %v68 = vld [vmem:[%s4] sm:$0xff]
    %v69 = vld [vmem:[%s4 + $0x8] sm:$0xff]
    %v70 = vld [vmem:[%s4 + $0x10] sm:$0xff]
    %v71 = vld [vmem:[%s4 + $0x18] sm:$0xff]
    %v72 = vld [vmem:[%s4 + $0x20] sm:$0xff]
    %v73 = vld [vmem:[%s4 + $0x28] sm:$0xff]
    %v74 = vld [vmem:[%s4 + $0x30] sm:$0xff]
    %v75 = vld [vmem:[%s4 + $0x38] sm:$0xff]
    %v76 = vld [vmem:[%s5] sm:$0xff]
    %v77 = vld [vmem:[%s5 + $0x8] sm:$0xff]
    %v78 = vld [vmem:[%s5 + $0x10] sm:$0xff]
    %v79 = vld [vmem:[%s5 + $0x18] sm:$0xff]
    %v80 = vld [vmem:[%s5 + $0x20] sm:$0xff]
    %v81 = vld [vmem:[%s5 + $0x28] sm:$0xff]
    %v82 = vld [vmem:[%s5 + $0x30] sm:$0xff]
    %v83 = vld [vmem:[%s5 + $0x38] sm:$0xff]
    %v84 = vld [vmem:[%s6] sm:$0xff]
    %v85 = vld [vmem:[%s6 + $0x8] sm:$0xff]
    %v86 = vld [vmem:[%s6 + $0x10] sm:$0xff]
    %v87 = vld [vmem:[%s6 + $0x18] sm:$0xff]
    %v88 = vld [vmem:[%s7] sm:$0x1]
    %v89 = vld [vmem:[#allocation2] sm:$0xff]
    %v90 = vld [vmem:[#allocation2 + $0x8] sm:$0xff]
    %v91 = vld [vmem:[#allocation2 + $0x10] sm:$0xff]
    %v92 = vld [vmem:[#allocation2 + $0x18] sm:$0xff]
    %v93 = vld [vmem:[#allocation2 + $0x20] sm:$0xff]
    %v94 = vld [vmem:[#allocation2 + $0x28] sm:$0xff]
    %v95 = vld [vmem:[#allocation2 + $0x30] sm:$0xff]
    %v96 = vld [vmem:[#allocation2 + $0x38] sm:$0xff]
    %v97 = vld [vmem:[#allocation2 + $0x40] sm:$0xff]
    %v98 = vld [vmem:[#allocation2 + $0x48] sm:$0xff]
    %v99 = vld [vmem:[#allocation2 + $0x50] sm:$0xff]
    %v100 = vld [vmem:[#allocation2 + $0x58] sm:$0xff]
    %v101 = vld [vmem:[#allocation2 + $0x60] sm:$0xff]
    %v102 = vld [vmem:[#allocation2 + $0x68] sm:$0xff]
    %v103 = vld [vmem:[#allocation2 + $0x70] sm:$0xff]
    %v104 = vld [vmem:[#allocation2 + $0x78] sm:$0xff]
    %v105 = vld [vmem:[#allocation2 + $0x80] sm:$0xff]
    %v106 = vld [vmem:[#allocation2 + $0x88] sm:$0xff]
    %v107 = vld [vmem:[#allocation2 + $0x90] sm:$0xff]
    %v108 = vld [vmem:[#allocation2 + $0x98] sm:$0xff]
    %v109 = vld [vmem:[#allocation2 + $0xa0] sm:$0xff]
    %v110 = vld [vmem:[#allocation2 + $0xa8] sm:$0xff]
    %v111 = vld [vmem:[#allocation2 + $0xb0] sm:$0xff]
    %v112 = vld [vmem:[#allocation2 + $0xb8] sm:$0xff]
    %v113 = vld [vmem:[#allocation2 + $0xc0] sm:$0xff]
    %v114 = vld [vmem:[#allocation2 + $0xc8] sm:$0xff]
    %v115 = vld [vmem:[#allocation2 + $0xd0] sm:$0xff]
    %v116 = vld [vmem:[#allocation2 + $0xd8] sm:$0xff]
    %v117 = vld [vmem:[#allocation2 + $0xe0] sm:$0xff]
    %v118 = vld [vmem:[#allocation2 + $0xe8] sm:$0xff]
    %v119 = vld [vmem:[#allocation2 + $0xf0] sm:$0xff]
    %v120 = vld [vmem:[#allocation2 + $0xf8] sm:$0xff]
    %v121 = vld [vmem:[%s1] sm:$0x7f]
    %v122 = vld [vmem:[%s1 + $0x8] sm:$0x7f]
    %vm123 = vcmask 56320
    %v125 = vsel %vm123, %v56, 0
    %v128 = vsel %vm123, %v57, 0
    %v131 = vsel %vm123, %v58, 0
    %v134 = vsel %vm123, %v59, 0
    %vm136 = vcmask 1046528
    %v138 = vsel %vm136, %v121, 0
    %v141 = vsel %vm136, %v122, 0
    %143 = vmatprep.subr.mxu0 0.0
    %144 = vmatpush1.msra.mxu0 0.0
    %145 = vmatprep.subr.mxu0 0.0
    %146 = vmatpush1.msra.mxu0 0.0
    %147 = vmatprep.subr.mxu0 0.0
    %148 = vmatpush1.msra.mxu0 0.0
    %149 = vmatprep.subr.mxu0 0.0
    %150 = vmatpush1.msra.mxu0 0.0
    %151 = vmatprep.subr.mxu0 0.0
    %152 = vmatpush1.msra.mxu0 0.0
    %153 = vmatprep.subr.mxu0 0.0
    %154 = vmatpush1.msra.mxu0 0.0
    %155 = vmatprep.subr.mxu0 0.0
    %156 = vmatpush1.msra.mxu0 0.0
    %157 = vmatprep.subr.mxu0 0.0
    %158 = vmatpush1.msra.mxu0 0.0
    %159 = vmatprep.subr.mxu0 0.0
    %160 = vmatpush1.msra.mxu0 0.0
    %161 = vmatprep.subr.mxu0 0.0
    %162 = vmatpush1.msra.mxu0 0.0
    %163 = vmatprep.subr.mxu0 0.0
    %164 = vmatpush1.msra.mxu0 0.0
    %165 = vmatprep.subr.mxu0 0.0
    %166 = vmatpush1.msra.mxu0 0.0
    %167 = vmatprep.subr.mxu0 0.0
    %168 = vmatpush1.msra.mxu0 0.0
    %169 = vmatprep.subr.mxu0 0.0
    %170 = vmatpush1.msra.mxu0 0.0
    %171 = vmatprep.subr.mxu0 0.0
    %172 = vmatpush1.msra.mxu0 0.0
    %173 = vmatprep.subr.mxu0 %v141
    %174 = vmatpush1.msra.mxu0 %v138
    %175 = vmatprep.subr.mxu0 0.0
    %176 = vmatpush2.msra.mxu0 0.0
    %177 = vmatprep.subr.mxu0 0.0
    %178 = vmatpush2.msra.mxu0 0.0
    %179 = vmatprep.subr.mxu0 0.0
    %180 = vmatpush2.msra.mxu0 0.0
    %181 = vmatprep.subr.mxu0 0.0
    %182 = vmatpush2.msra.mxu0 0.0
    %183 = vmatprep.subr.mxu0 0.0
    %184 = vmatpush2.msra.mxu0 0.0
    %185 = vmatprep.subr.mxu0 0.0
    %186 = vmatpush2.msra.mxu0 0.0
    %187 = vmatprep.subr.mxu0 0.0
    %188 = vmatpush2.msra.mxu0 0.0
    %189 = vmatprep.subr.mxu0 0.0
    %190 = vmatpush2.msra.mxu0 0.0
    %191 = vmatprep.subr.mxu0 0.0
    %192 = vmatpush2.msra.mxu0 0.0
    %193 = vmatprep.subr.mxu0 0.0
    %194 = vmatpush2.msra.mxu0 0.0
    %195 = vmatprep.subr.mxu0 0.0
    %196 = vmatpush2.msra.mxu0 0.0
    %197 = vmatprep.subr.mxu0 0.0
    %198 = vmatpush2.msra.mxu0 0.0
    %199 = vmatprep.subr.mxu0 0.0
    %200 = vmatpush2.msra.mxu0 0.0
    %201 = vmatprep.subr.mxu0 0.0
    %202 = vmatpush2.msra.mxu0 0.0
    %203 = vmatprep.subr.mxu0 0.0
    %204 = vmatpush2.msra.mxu0 0.0
    %205 = vmatprep.subr.mxu0 0.0
    %206 = vmatpush2.msra.mxu0 0.0
    %207 = vmatprep.mubr.f32.mxu0 0.0
    %208 = vmatmul.mubr.f32.gmra.mxu0 %v125
    %v209 = vpop.f32.mrf.mxu0
    %v210 = vadd.f32 0.0, %v209
    %v211 = vpop.f32.mrf.mxu0
    %v212 = vadd.f32 0.0, %v211
    %213 = vmatprep.mubr.f32.mxu0 0.0
    %214 = vmatmul.mubr.f32.gmra.mxu0 %v128
    %v215 = vpop.f32.mrf.mxu0
    %v216 = vadd.f32 0.0, %v215
    %v217 = vpop.f32.mrf.mxu0
    %v218 = vadd.f32 0.0, %v217
    %219 = vmatprep.mubr.f32.mxu0 0.0
    %220 = vmatmul.mubr.f32.gmra.mxu0 %v131
    %v221 = vpop.f32.mrf.mxu0
    %v222 = vadd.f32 0.0, %v221
    %v223 = vpop.f32.mrf.mxu0
    %v224 = vadd.f32 0.0, %v223
    %225 = vmatprep.mubr.f32.mxu0 0.0
    %226 = vmatmul.mubr.f32.gmra.mxu0 %v134
    %v227 = vpop.f32.mrf.mxu0
    %v228 = vadd.f32 0.0, %v227
    %v229 = vpop.f32.mrf.mxu0
    %v230 = vadd.f32 0.0, %v229
    %231 = vdwg.mxu0
    %v232 = vadd.f32 %v210, %v216
    %v233 = vadd.f32 %v232, %v222
    %v234 = vadd.f32 %v233, %v228
    %v235 = vrot.slane %v234, 4
    %v236 = vadd.f32 %v234, %v235
    %v237 = vrot.slane %v236, 2
    %v238 = vadd.f32 %v236, %v237
    %v239 = vrot.slane %v238, 1
    %v240 = vadd.f32 %v238, %v239
    %v241 = vadd.f32 %v212, %v218
    %v242 = vadd.f32 %v241, %v224
    %v243 = vadd.f32 %v242, %v230
    %v244 = vrot.slane %v243, 4
    %v245 = vadd.f32 %v243, %v244
    %v246 = vrot.slane %v245, 2
    %v247 = vadd.f32 %v245, %v246
    %v248 = vrot.slane %v247, 1
    %v249 = vadd.f32 %v247, %v248
    %v250 = vrcp.pop 32.0
    %v251 = vmul.f32 %v240, %v250
    %v252 = vmul.f32 %v249, %v250
    %v253 = vmul.f32 %v210, %v210
    %v254 = vmul.f32 %v212, %v212
    %v255 = vmul.f32 %v216, %v216
    %v256 = vmul.f32 %v218, %v218
    %v257 = vmul.f32 %v222, %v222
    %v258 = vmul.f32 %v224, %v224
    %v259 = vmul.f32 %v228, %v228
    %v260 = vmul.f32 %v230, %v230
    %v261 = vadd.f32 %v253, %v255
    %v262 = vadd.f32 %v261, %v257
    %v263 = vadd.f32 %v262, %v259
    %v264 = vrot.slane %v263, 4
    %v265 = vadd.f32 %v263, %v264
    %v266 = vrot.slane %v265, 2
    %v267 = vadd.f32 %v265, %v266
    %v268 = vrot.slane %v267, 1
    %v269 = vadd.f32 %v267, %v268
    %v270 = vadd.f32 %v254, %v256
    %v271 = vadd.f32 %v270, %v258
    %v272 = vadd.f32 %v271, %v260
    %v273 = vrot.slane %v272, 4
    %v274 = vadd.f32 %v272, %v273
    %v275 = vrot.slane %v274, 2
    %v276 = vadd.f32 %v274, %v275
    %v277 = vrot.slane %v276, 1
    %v278 = vadd.f32 %v276, %v277
    %v279 = vmul.f32 %v269, %v250
    %v280 = vmul.f32 %v278, %v250
    %v281 = vmul.f32 %v251, %v251
    %v282 = vmul.f32 %v252, %v252
    %v283 = vsub.f32 %v279, %v281
    %v284 = vsub.f32 %v280, %v282
    %v285 = vmax.f32 %v283, 0.0
    %v286 = vmax.f32 %v284, 0.0
    %v287 = vsub.f32 %v210, %v251
    %v288 = vsub.f32 %v212, %v252
    %v289 = vsub.f32 %v216, %v251
    %v290 = vsub.f32 %v218, %v252
    %v291 = vsub.f32 %v222, %v251
    %v292 = vsub.f32 %v224, %v252
    %v293 = vsub.f32 %v228, %v251
    %v294 = vsub.f32 %v230, %v252
    %v295 = vadd.f32 %v285, 1e-05
    %v296 = vadd.f32 %v286, 1e-05
    %v297 = vrsqrt.pop %v295
    %v298 = vrsqrt.pop %v296
    %v299 = vmul.f32 %v287, %v297
    %v300 = vmul.f32 %v288, %v298
    %v301 = vmul.f32 %v289, %v297
    %v302 = vmul.f32 %v290, %v298
    %v303 = vmul.f32 %v291, %v297
    %v304 = vmul.f32 %v292, %v298
    %v305 = vmul.f32 %v293, %v297
    %v306 = vmul.f32 %v294, %v298
    %308 = vset.pattern.permute.xlu0 0
    %309 = vperm.xlu0 %308, %v47
    %v310 = vpop.permute.xlu0 %309
    %313 = vset.pattern.permute.xlu0 0
    %314 = vperm.xlu0 %313, %v48
    %v315 = vpop.permute.xlu0 %314
    %318 = vset.pattern.permute.xlu0 0
    %319 = vperm.xlu0 %318, %v49
    %v320 = vpop.permute.xlu0 %319
    %323 = vset.pattern.permute.xlu0 0
    %324 = vperm.xlu0 %323, %v50
    %v325 = vpop.permute.xlu0 %324
    %v327 = vmul.f32 %v299, %v310
    %v328 = vmul.f32 %v300, %v310
    %v329 = vmul.f32 %v301, %v315
    %v330 = vmul.f32 %v302, %v315
    %v331 = vmul.f32 %v303, %v320
    %v332 = vmul.f32 %v304, %v320
    %v333 = vmul.f32 %v305, %v325
    %v334 = vmul.f32 %v306, %v325
    %335 = vset.pattern.permute.xlu0 1
    %336 = vperm.xlu0 %335, %v47
    %v337 = vpop.permute.xlu0 %336
    %339 = vset.pattern.permute.xlu0 1
    %340 = vperm.xlu0 %339, %v48
    %v341 = vpop.permute.xlu0 %340
    %343 = vset.pattern.permute.xlu0 1
    %344 = vperm.xlu0 %343, %v49
    %v345 = vpop.permute.xlu0 %344
    %347 = vset.pattern.permute.xlu0 1
    %348 = vperm.xlu0 %347, %v50
    %v349 = vpop.permute.xlu0 %348
    %v351 = vadd.f32 %v327, %v337
    %v352 = vadd.f32 %v328, %v337
    %v353 = vadd.f32 %v329, %v341
    %v354 = vadd.f32 %v330, %v341
    %v355 = vadd.f32 %v331, %v345
    %v356 = vadd.f32 %v332, %v345
    %v357 = vadd.f32 %v333, %v349
    %v358 = vadd.f32 %v334, %v349
    %v359 = vmax.f32 %v351, 0.0
    %v360 = vmax.f32 %v352, 0.0
    %v361 = vmax.f32 %v353, 0.0
    %v362 = vmax.f32 %v354, 0.0
    %v363 = vmax.f32 %v355, 0.0
    %v364 = vmax.f32 %v356, 0.0
    %v365 = vmax.f32 %v357, 0.0
    %v366 = vmax.f32 %v358, 0.0
    %vm367 = vcmask 261120
    %v369 = vsel %vm367, %v60, 0
    %v372 = vsel %vm367, %v61, 0
    %v375 = vsel %vm367, %v62, 0
    %v378 = vsel %vm367, %v63, 0
    %v381 = vsel %vm367, %v64, 0
    %v384 = vsel %vm367, %v65, 0
    %v387 = vsel %vm367, %v66, 0
    %v390 = vsel %vm367, %v67, 0
    %392 = vmatprep.subr.mxu0 0.0
    %393 = vmatpush1.msra.mxu0 0.0
    %394 = vmatprep.subr.mxu0 0.0
    %395 = vmatpush1.msra.mxu0 0.0
    %396 = vmatprep.subr.mxu0 0.0
    %397 = vmatpush1.msra.mxu0 0.0
    %398 = vmatprep.subr.mxu0 0.0
    %399 = vmatpush1.msra.mxu0 0.0
    %400 = vmatprep.subr.mxu0 0.0
    %401 = vmatpush1.msra.mxu0 0.0
    %402 = vmatprep.subr.mxu0 0.0
    %403 = vmatpush1.msra.mxu0 0.0
    %404 = vmatprep.subr.mxu0 0.0
    %405 = vmatpush1.msra.mxu0 0.0
    %406 = vmatprep.subr.mxu0 0.0
    %407 = vmatpush1.msra.mxu0 0.0
    %408 = vmatprep.subr.mxu0 0.0
    %409 = vmatpush1.msra.mxu0 0.0
    %410 = vmatprep.subr.mxu0 0.0
    %411 = vmatpush1.msra.mxu0 0.0
    %412 = vmatprep.subr.mxu0 0.0
    %413 = vmatpush1.msra.mxu0 0.0
    %414 = vmatprep.subr.mxu0 0.0
    %415 = vmatpush1.msra.mxu0 0.0
    %416 = vmatprep.subr.mxu0 %v366
    %417 = vmatpush1.msra.mxu0 %v365
    %418 = vmatprep.subr.mxu0 %v364
    %419 = vmatpush1.msra.mxu0 %v363
    %420 = vmatprep.subr.mxu0 %v362
    %421 = vmatpush1.msra.mxu0 %v361
    %422 = vmatprep.subr.mxu0 %v360
    %423 = vmatpush1.msra.mxu0 %v359
    %424 = vmatprep.subr.mxu0 0.0
    %425 = vmatpush2.msra.mxu0 0.0
    %426 = vmatprep.subr.mxu0 0.0
    %427 = vmatpush2.msra.mxu0 0.0
    %428 = vmatprep.subr.mxu0 0.0
    %429 = vmatpush2.msra.mxu0 0.0
    %430 = vmatprep.subr.mxu0 0.0
    %431 = vmatpush2.msra.mxu0 0.0
    %432 = vmatprep.subr.mxu0 0.0
    %433 = vmatpush2.msra.mxu0 0.0
    %434 = vmatprep.subr.mxu0 0.0
    %435 = vmatpush2.msra.mxu0 0.0
    %436 = vmatprep.subr.mxu0 0.0
    %437 = vmatpush2.msra.mxu0 0.0
    %438 = vmatprep.subr.mxu0 0.0
    %439 = vmatpush2.msra.mxu0 0.0
    %440 = vmatprep.subr.mxu0 0.0
    %441 = vmatpush2.msra.mxu0 0.0
    %442 = vmatprep.subr.mxu0 0.0
    %443 = vmatpush2.msra.mxu0 0.0
    %444 = vmatprep.subr.mxu0 0.0
    %445 = vmatpush2.msra.mxu0 0.0
    %446 = vmatprep.subr.mxu0 0.0
    %447 = vmatpush2.msra.mxu0 0.0
    %448 = vmatprep.subr.mxu0 0.0
    %449 = vmatpush2.msra.mxu0 0.0
    %450 = vmatprep.subr.mxu0 0.0
    %451 = vmatpush2.msra.mxu0 0.0
    %452 = vmatprep.subr.mxu0 0.0
    %453 = vmatpush2.msra.mxu0 0.0
    %454 = vmatprep.subr.mxu0 0.0
    %455 = vmatpush2.msra.mxu0 0.0
    %456 = vmatprep.mubr.f32.mxu0 0.0
    %457 = vmatmul.mubr.f32.gmra.mxu0 %v369
    %v458 = vpop.f32.mrf.mxu0
    %v459 = vadd.f32 0.0, %v458
    %v460 = vpop.f32.mrf.mxu0
    %v461 = vadd.f32 0.0, %v460
    %462 = vmatprep.mubr.f32.mxu0 0.0
    %463 = vmatmul.mubr.f32.gmra.mxu0 %v372
    %v464 = vpop.f32.mrf.mxu0
    %v465 = vadd.f32 0.0, %v464
    %v466 = vpop.f32.mrf.mxu0
    %v467 = vadd.f32 0.0, %v466
    %468 = vmatprep.mubr.f32.mxu0 0.0
    %469 = vmatmul.mubr.f32.gmra.mxu0 %v375
    %v470 = vpop.f32.mrf.mxu0
    %v471 = vadd.f32 0.0, %v470
    %v472 = vpop.f32.mrf.mxu0
    %v473 = vadd.f32 0.0, %v472
    %474 = vmatprep.mubr.f32.mxu0 0.0
    %475 = vmatmul.mubr.f32.gmra.mxu0 %v378
    %v476 = vpop.f32.mrf.mxu0
    %v477 = vadd.f32 0.0, %v476
    %v478 = vpop.f32.mrf.mxu0
    %v479 = vadd.f32 0.0, %v478
    %480 = vmatprep.mubr.f32.mxu0 0.0
    %481 = vmatmul.mubr.f32.gmra.mxu0 %v381
    %v482 = vpop.f32.mrf.mxu0
    %v483 = vadd.f32 0.0, %v482
    %v484 = vpop.f32.mrf.mxu0
    %v485 = vadd.f32 0.0, %v484
    %486 = vmatprep.mubr.f32.mxu0 0.0
    %487 = vmatmul.mubr.f32.gmra.mxu0 %v384
    %v488 = vpop.f32.mrf.mxu0
    %v489 = vadd.f32 0.0, %v488
    %v490 = vpop.f32.mrf.mxu0
    %v491 = vadd.f32 0.0, %v490
    %492 = vmatprep.mubr.f32.mxu0 0.0
    %493 = vmatmul.mubr.f32.gmra.mxu0 %v387
    %v494 = vpop.f32.mrf.mxu0
    %v495 = vadd.f32 0.0, %v494
    %v496 = vpop.f32.mrf.mxu0
    %v497 = vadd.f32 0.0, %v496
    %498 = vmatprep.mubr.f32.mxu0 0.0
    %499 = vmatmul.mubr.f32.gmra.mxu0 %v390
    %v500 = vpop.f32.mrf.mxu0
    %v501 = vadd.f32 0.0, %v500
    %v502 = vpop.f32.mrf.mxu0
    %v503 = vadd.f32 0.0, %v502
    %504 = vdwg.mxu0
    %vm505 = vcmask 523264
    %v507 = vsel %vm505, %v68, 0
    %v510 = vsel %vm505, %v69, 0
    %v513 = vsel %vm505, %v70, 0
    %v516 = vsel %vm505, %v71, 0
    %v519 = vsel %vm505, %v72, 0
    %v522 = vsel %vm505, %v73, 0
    %v525 = vsel %vm505, %v74, 0
    %v528 = vsel %vm505, %v75, 0
    %530 = vmatprep.subr.mxu0 0.0
    %531 = vmatpush1.msra.mxu0 0.0
    %532 = vmatprep.subr.mxu0 0.0
    %533 = vmatpush1.msra.mxu0 0.0
    %534 = vmatprep.subr.mxu0 0.0
    %535 = vmatpush1.msra.mxu0 0.0
    %536 = vmatprep.subr.mxu0 0.0
    %537 = vmatpush1.msra.mxu0 0.0
    %538 = vmatprep.subr.mxu0 0.0
    %539 = vmatpush1.msra.mxu0 0.0
    %540 = vmatprep.subr.mxu0 0.0
    %541 = vmatpush1.msra.mxu0 0.0
    %542 = vmatprep.subr.mxu0 0.0
    %543 = vmatpush1.msra.mxu0 0.0
    %544 = vmatprep.subr.mxu0 0.0
    %545 = vmatpush1.msra.mxu0 0.0
    %546 = vmatprep.subr.mxu0 %v503
    %547 = vmatpush1.msra.mxu0 %v501
    %548 = vmatprep.subr.mxu0 %v497
    %549 = vmatpush1.msra.mxu0 %v495
    %550 = vmatprep.subr.mxu0 %v491
    %551 = vmatpush1.msra.mxu0 %v489
    %552 = vmatprep.subr.mxu0 %v485
    %553 = vmatpush1.msra.mxu0 %v483
    %554 = vmatprep.subr.mxu0 %v479
    %555 = vmatpush1.msra.mxu0 %v477
    %556 = vmatprep.subr.mxu0 %v473
    %557 = vmatpush1.msra.mxu0 %v471
    %558 = vmatprep.subr.mxu0 %v467
    %559 = vmatpush1.msra.mxu0 %v465
    %560 = vmatprep.subr.mxu0 %v461
    %561 = vmatpush1.msra.mxu0 %v459
    %562 = vmatprep.subr.mxu0 0.0
    %563 = vmatpush2.msra.mxu0 0.0
    %564 = vmatprep.subr.mxu0 0.0
    %565 = vmatpush2.msra.mxu0 0.0
    %566 = vmatprep.subr.mxu0 0.0
    %567 = vmatpush2.msra.mxu0 0.0
    %568 = vmatprep.subr.mxu0 0.0
    %569 = vmatpush2.msra.mxu0 0.0
    %570 = vmatprep.subr.mxu0 0.0
    %571 = vmatpush2.msra.mxu0 0.0
    %572 = vmatprep.subr.mxu0 0.0
    %573 = vmatpush2.msra.mxu0 0.0
    %574 = vmatprep.subr.mxu0 0.0
    %575 = vmatpush2.msra.mxu0 0.0
    %576 = vmatprep.subr.mxu0 0.0
    %577 = vmatpush2.msra.mxu0 0.0
    %578 = vmatprep.subr.mxu0 0.0
    %579 = vmatpush2.msra.mxu0 0.0
    %580 = vmatprep.subr.mxu0 0.0
    %581 = vmatpush2.msra.mxu0 0.0
    %582 = vmatprep.subr.mxu0 0.0
    %583 = vmatpush2.msra.mxu0 0.0
    %584 = vmatprep.subr.mxu0 0.0
    %585 = vmatpush2.msra.mxu0 0.0
    %586 = vmatprep.subr.mxu0 0.0
    %587 = vmatpush2.msra.mxu0 0.0
    %588 = vmatprep.subr.mxu0 0.0
    %589 = vmatpush2.msra.mxu0 0.0
    %590 = vmatprep.subr.mxu0 0.0
    %591 = vmatpush2.msra.mxu0 0.0
    %592 = vmatprep.subr.mxu0 0.0
    %593 = vmatpush2.msra.mxu0 0.0
    %594 = vmatprep.mubr.f32.mxu0 0.0
    %595 = vmatmul.mubr.f32.gmra.mxu0 %v507
    %v596 = vpop.f32.mrf.mxu0
    %v597 = vadd.f32 0.0, %v596
    %v598 = vpop.f32.mrf.mxu0
    %v599 = vadd.f32 0.0, %v598
    %600 = vmatprep.mubr.f32.mxu0 0.0
    %601 = vmatmul.mubr.f32.gmra.mxu0 %v510
    %v602 = vpop.f32.mrf.mxu0
    %v603 = vadd.f32 0.0, %v602
    %v604 = vpop.f32.mrf.mxu0
    %v605 = vadd.f32 0.0, %v604
    %606 = vmatprep.mubr.f32.mxu0 0.0
    %607 = vmatmul.mubr.f32.gmra.mxu0 %v513
    %v608 = vpop.f32.mrf.mxu0
    %v609 = vadd.f32 0.0, %v608
    %v610 = vpop.f32.mrf.mxu0
    %v611 = vadd.f32 0.0, %v610
    %612 = vmatprep.mubr.f32.mxu0 0.0
    %613 = vmatmul.mubr.f32.gmra.mxu0 %v516
    %v614 = vpop.f32.mrf.mxu0
    %v615 = vadd.f32 0.0, %v614
    %v616 = vpop.f32.mrf.mxu0
    %v617 = vadd.f32 0.0, %v616
    %618 = vmatprep.mubr.f32.mxu0 0.0
    %619 = vmatmul.mubr.f32.gmra.mxu0 %v519
    %v620 = vpop.f32.mrf.mxu0
    %v621 = vadd.f32 0.0, %v620
    %v622 = vpop.f32.mrf.mxu0
    %v623 = vadd.f32 0.0, %v622
    %624 = vmatprep.mubr.f32.mxu0 0.0
    %625 = vmatmul.mubr.f32.gmra.mxu0 %v522
    %v626 = vpop.f32.mrf.mxu0
    %v627 = vadd.f32 0.0, %v626
    %v628 = vpop.f32.mrf.mxu0
    %v629 = vadd.f32 0.0, %v628
    %630 = vmatprep.mubr.f32.mxu0 0.0
    %631 = vmatmul.mubr.f32.gmra.mxu0 %v525
    %v632 = vpop.f32.mrf.mxu0
    %v633 = vadd.f32 0.0, %v632
    %v634 = vpop.f32.mrf.mxu0
    %v635 = vadd.f32 0.0, %v634
    %636 = vmatprep.mubr.f32.mxu0 0.0
    %637 = vmatmul.mubr.f32.gmra.mxu0 %v528
    %v638 = vpop.f32.mrf.mxu0
    %v639 = vadd.f32 0.0, %v638
    %v640 = vpop.f32.mrf.mxu0
    %v641 = vadd.f32 0.0, %v640
    %642 = vdwg.mxu0
    %643 = vmatprep.subr.mxu0 %v120
    %644 = vmatpush1.msra.mxu0 %v119
    %645 = vmatprep.subr.mxu0 %v118
    %646 = vmatpush1.msra.mxu0 %v117
    %647 = vmatprep.subr.mxu0 %v116
    %648 = vmatpush1.msra.mxu0 %v115
    %649 = vmatprep.subr.mxu0 %v114
    %650 = vmatpush1.msra.mxu0 %v113
    %651 = vmatprep.subr.mxu0 %v112
    %652 = vmatpush1.msra.mxu0 %v111
    %653 = vmatprep.subr.mxu0 %v110
    %654 = vmatpush1.msra.mxu0 %v109
    %655 = vmatprep.subr.mxu0 %v108
    %656 = vmatpush1.msra.mxu0 %v107
    %657 = vmatprep.subr.mxu0 %v106
    %658 = vmatpush1.msra.mxu0 %v105
    %659 = vmatprep.subr.mxu0 %v104
    %660 = vmatpush1.msra.mxu0 %v103
    %661 = vmatprep.subr.mxu0 %v102
    %662 = vmatpush1.msra.mxu0 %v101
    %663 = vmatprep.subr.mxu0 %v100
    %664 = vmatpush1.msra.mxu0 %v99
    %665 = vmatprep.subr.mxu0 %v98
    %666 = vmatpush1.msra.mxu0 %v97
    %667 = vmatprep.subr.mxu0 %v96
    %668 = vmatpush1.msra.mxu0 %v95
    %669 = vmatprep.subr.mxu0 %v94
    %670 = vmatpush1.msra.mxu0 %v93
    %671 = vmatprep.subr.mxu0 %v92
    %672 = vmatpush1.msra.mxu0 %v91
    %673 = vmatprep.subr.mxu0 %v90
    %674 = vmatpush1.msra.mxu0 %v89
    %675 = vmatprep.subr.mxu0 0.0
    %676 = vmatpush2.msra.mxu0 0.0
    %677 = vmatprep.subr.mxu0 0.0
    %678 = vmatpush2.msra.mxu0 0.0
    %679 = vmatprep.subr.mxu0 0.0
    %680 = vmatpush2.msra.mxu0 0.0
    %681 = vmatprep.subr.mxu0 0.0
    %682 = vmatpush2.msra.mxu0 0.0
    %683 = vmatprep.subr.mxu0 0.0
    %684 = vmatpush2.msra.mxu0 0.0
    %685 = vmatprep.subr.mxu0 0.0
    %686 = vmatpush2.msra.mxu0 0.0
    %687 = vmatprep.subr.mxu0 0.0
    %688 = vmatpush2.msra.mxu0 0.0
    %689 = vmatprep.subr.mxu0 0.0
    %690 = vmatpush2.msra.mxu0 0.0
    %691 = vmatprep.subr.mxu0 0.0
    %692 = vmatpush2.msra.mxu0 0.0
    %693 = vmatprep.subr.mxu0 0.0
    %694 = vmatpush2.msra.mxu0 0.0
    %695 = vmatprep.subr.mxu0 0.0
    %696 = vmatpush2.msra.mxu0 0.0
    %697 = vmatprep.subr.mxu0 0.0
    %698 = vmatpush2.msra.mxu0 0.0
    %699 = vmatprep.subr.mxu0 0.0
    %700 = vmatpush2.msra.mxu0 0.0
    %701 = vmatprep.subr.mxu0 0.0
    %702 = vmatpush2.msra.mxu0 0.0
    %703 = vmatprep.subr.mxu0 0.0
    %704 = vmatpush2.msra.mxu0 0.0
    %705 = vmatprep.subr.mxu0 0.0
    %706 = vmatpush2.msra.mxu0 0.0
    %707 = vmatprep.mubr.f32.mxu0 0.0
    %708 = vmatmul.mubr.f32.gmra.mxu0 %v76
    %v709 = vpop.f32.mrf.mxu0
    %v710 = vadd.f32 %v597, %v709
    %v711 = vpop.f32.mrf.mxu0
    %v712 = vadd.f32 %v599, %v711
    %713 = vmatprep.mubr.f32.mxu0 0.0
    %714 = vmatmul.mubr.f32.gmra.mxu0 %v77
    %v715 = vpop.f32.mrf.mxu0
    %v716 = vadd.f32 %v603, %v715
    %v717 = vpop.f32.mrf.mxu0
    %v718 = vadd.f32 %v605, %v717
    %719 = vmatprep.mubr.f32.mxu0 0.0
    %720 = vmatmul.mubr.f32.gmra.mxu0 %v78
    %v721 = vpop.f32.mrf.mxu0
    %v722 = vadd.f32 %v609, %v721
    %v723 = vpop.f32.mrf.mxu0
    %v724 = vadd.f32 %v611, %v723
    %725 = vmatprep.mubr.f32.mxu0 0.0
    %726 = vmatmul.mubr.f32.gmra.mxu0 %v79
    %v727 = vpop.f32.mrf.mxu0
    %v728 = vadd.f32 %v615, %v727
    %v729 = vpop.f32.mrf.mxu0
    %v730 = vadd.f32 %v617, %v729
    %731 = vmatprep.mubr.f32.mxu0 0.0
    %732 = vmatmul.mubr.f32.gmra.mxu0 %v80
    %v733 = vpop.f32.mrf.mxu0
    %v734 = vadd.f32 %v621, %v733
    %v735 = vpop.f32.mrf.mxu0
    %v736 = vadd.f32 %v623, %v735
    %737 = vmatprep.mubr.f32.mxu0 0.0
    %738 = vmatmul.mubr.f32.gmra.mxu0 %v81
    %v739 = vpop.f32.mrf.mxu0
    %v740 = vadd.f32 %v627, %v739
    %v741 = vpop.f32.mrf.mxu0
    %v742 = vadd.f32 %v629, %v741
    %743 = vmatprep.mubr.f32.mxu0 0.0
    %744 = vmatmul.mubr.f32.gmra.mxu0 %v82
    %v745 = vpop.f32.mrf.mxu0
    %v746 = vadd.f32 %v633, %v745
    %v747 = vpop.f32.mrf.mxu0
    %v748 = vadd.f32 %v635, %v747
    %749 = vmatprep.mubr.f32.mxu0 0.0
    %750 = vmatmul.mubr.f32.gmra.mxu0 %v83
    %v751 = vpop.f32.mrf.mxu0
    %v752 = vadd.f32 %v639, %v751
    %v753 = vpop.f32.mrf.mxu0
    %v754 = vadd.f32 %v641, %v753
    %755 = vdwg.mxu0
    %756 = vset.pattern.permute.xlu0 2
    %757 = vperm.xlu0 %756, %v47
    %v758 = vpop.permute.xlu0 %757
    %760 = vset.pattern.permute.xlu0 2
    %761 = vperm.xlu0 %760, %v48
    %v762 = vpop.permute.xlu0 %761
    %764 = vset.pattern.permute.xlu0 2
    %765 = vperm.xlu0 %764, %v49
    %v766 = vpop.permute.xlu0 %765
    %768 = vset.pattern.permute.xlu0 2
    %769 = vperm.xlu0 %768, %v50
    %v770 = vpop.permute.xlu0 %769
    %773 = vset.pattern.permute.xlu0 2
    %774 = vperm.xlu0 %773, %v51
    %v775 = vpop.permute.xlu0 %774
    %778 = vset.pattern.permute.xlu0 2
    %779 = vperm.xlu0 %778, %v52
    %v780 = vpop.permute.xlu0 %779
    %783 = vset.pattern.permute.xlu0 2
    %784 = vperm.xlu0 %783, %v53
    %v785 = vpop.permute.xlu0 %784
    %788 = vset.pattern.permute.xlu0 2
    %789 = vperm.xlu0 %788, %v54
    %v790 = vpop.permute.xlu0 %789
    %v792 = vadd.f32 %v710, %v758
    %v793 = vadd.f32 %v712, %v758
    %v794 = vadd.f32 %v716, %v762
    %v795 = vadd.f32 %v718, %v762
    %v796 = vadd.f32 %v722, %v766
    %v797 = vadd.f32 %v724, %v766
    %v798 = vadd.f32 %v728, %v770
    %v799 = vadd.f32 %v730, %v770
    %v800 = vadd.f32 %v734, %v775
    %v801 = vadd.f32 %v736, %v775
    %v802 = vadd.f32 %v740, %v780
    %v803 = vadd.f32 %v742, %v780
    %v804 = vadd.f32 %v746, %v785
    %v805 = vadd.f32 %v748, %v785
    %v806 = vadd.f32 %v752, %v790
    %v807 = vadd.f32 %v754, %v790
    %v808 = vadd.f32 %v792, %v794
    %v809 = vadd.f32 %v808, %v796
    %v810 = vadd.f32 %v809, %v798
    %v811 = vadd.f32 %v810, %v800
    %v812 = vadd.f32 %v811, %v802
    %v813 = vadd.f32 %v812, %v804
    %v814 = vadd.f32 %v813, %v806
    %v815 = vrot.slane %v814, 4
    %v816 = vadd.f32 %v814, %v815
    %v817 = vrot.slane %v816, 2
    %v818 = vadd.f32 %v816, %v817
    %v819 = vrot.slane %v818, 1
    %v820 = vadd.f32 %v818, %v819
    %v821 = vadd.f32 %v793, %v795
    %v822 = vadd.f32 %v821, %v797
    %v823 = vadd.f32 %v822, %v799
    %v824 = vadd.f32 %v823, %v801
    %v825 = vadd.f32 %v824, %v803
    %v826 = vadd.f32 %v825, %v805
    %v827 = vadd.f32 %v826, %v807
    %v828 = vrot.slane %v827, 4
    %v829 = vadd.f32 %v827, %v828
    %v830 = vrot.slane %v829, 2
    %v831 = vadd.f32 %v829, %v830
    %v832 = vrot.slane %v831, 1
    %v833 = vadd.f32 %v831, %v832
    %v834 = vrcp.pop 64.0
    %v835 = vmul.f32 %v820, %v834
    %v836 = vmul.f32 %v833, %v834
    %v837 = vmul.f32 %v792, %v792
    %v838 = vmul.f32 %v793, %v793
    %v839 = vmul.f32 %v794, %v794
    %v840 = vmul.f32 %v795, %v795
    %v841 = vmul.f32 %v796, %v796
    %v842 = vmul.f32 %v797, %v797
    %v843 = vmul.f32 %v798, %v798
    %v844 = vmul.f32 %v799, %v799
    %v845 = vmul.f32 %v800, %v800
    %v846 = vmul.f32 %v801, %v801
    %v847 = vmul.f32 %v802, %v802
    %v848 = vmul.f32 %v803, %v803
    %v849 = vmul.f32 %v804, %v804
    %v850 = vmul.f32 %v805, %v805
    %v851 = vmul.f32 %v806, %v806
    %v852 = vmul.f32 %v807, %v807
    %v853 = vadd.f32 %v837, %v839
    %v854 = vadd.f32 %v853, %v841
    %v855 = vadd.f32 %v854, %v843
    %v856 = vadd.f32 %v855, %v845
    %v857 = vadd.f32 %v856, %v847
    %v858 = vadd.f32 %v857, %v849
    %v859 = vadd.f32 %v858, %v851
    %v860 = vrot.slane %v859, 4
    %v861 = vadd.f32 %v859, %v860
    %v862 = vrot.slane %v861, 2
    %v863 = vadd.f32 %v861, %v862
    %v864 = vrot.slane %v863, 1
    %v865 = vadd.f32 %v863, %v864
    %v866 = vadd.f32 %v838, %v840
    %v867 = vadd.f32 %v866, %v842
    %v868 = vadd.f32 %v867, %v844
    %v869 = vadd.f32 %v868, %v846
    %v870 = vadd.f32 %v869, %v848
    %v871 = vadd.f32 %v870, %v850
    %v872 = vadd.f32 %v871, %v852
    %v873 = vrot.slane %v872, 4
    %v874 = vadd.f32 %v872, %v873
    %v875 = vrot.slane %v874, 2
    %v876 = vadd.f32 %v874, %v875
    %v877 = vrot.slane %v876, 1
    %v878 = vadd.f32 %v876, %v877
    %v879 = vmul.f32 %v865, %v834
    %v880 = vmul.f32 %v878, %v834
    %v881 = vmul.f32 %v835, %v835
    %v882 = vmul.f32 %v836, %v836
    %v883 = vsub.f32 %v879, %v881
    %v884 = vsub.f32 %v880, %v882
    %v885 = vmax.f32 %v883, 0.0
    %v886 = vmax.f32 %v884, 0.0
    %v887 = vsub.f32 %v792, %v835
    %v888 = vsub.f32 %v793, %v836
    %v889 = vsub.f32 %v794, %v835
    %v890 = vsub.f32 %v795, %v836
    %v891 = vsub.f32 %v796, %v835
    %v892 = vsub.f32 %v797, %v836
    %v893 = vsub.f32 %v798, %v835
    %v894 = vsub.f32 %v799, %v836
    %v895 = vsub.f32 %v800, %v835
    %v896 = vsub.f32 %v801, %v836
    %v897 = vsub.f32 %v802, %v835
    %v898 = vsub.f32 %v803, %v836
    %v899 = vsub.f32 %v804, %v835
    %v900 = vsub.f32 %v805, %v836
    %v901 = vsub.f32 %v806, %v835
    %v902 = vsub.f32 %v807, %v836
    %v903 = vadd.f32 %v885, 1e-05
    %v904 = vadd.f32 %v886, 1e-05
    %v905 = vrsqrt.pop %v903
    %v906 = vrsqrt.pop %v904
    %v907 = vmul.f32 %v887, %v905
    %v908 = vmul.f32 %v888, %v906
    %v909 = vmul.f32 %v889, %v905
    %v910 = vmul.f32 %v890, %v906
    %v911 = vmul.f32 %v891, %v905
    %v912 = vmul.f32 %v892, %v906
    %v913 = vmul.f32 %v893, %v905
    %v914 = vmul.f32 %v894, %v906
    %v915 = vmul.f32 %v895, %v905
    %v916 = vmul.f32 %v896, %v906
    %v917 = vmul.f32 %v897, %v905
    %v918 = vmul.f32 %v898, %v906
    %v919 = vmul.f32 %v899, %v905
    %v920 = vmul.f32 %v900, %v906
    %v921 = vmul.f32 %v901, %v905
    %v922 = vmul.f32 %v902, %v906
    %923 = vset.pattern.permute.xlu0 3
    %924 = vperm.xlu0 %923, %v47
    %v925 = vpop.permute.xlu0 %924
    %927 = vset.pattern.permute.xlu0 3
    %928 = vperm.xlu0 %927, %v48
    %v929 = vpop.permute.xlu0 %928
    %931 = vset.pattern.permute.xlu0 3
    %932 = vperm.xlu0 %931, %v49
    %v933 = vpop.permute.xlu0 %932
    %935 = vset.pattern.permute.xlu0 3
    %936 = vperm.xlu0 %935, %v50
    %v937 = vpop.permute.xlu0 %936
    %939 = vset.pattern.permute.xlu0 3
    %940 = vperm.xlu0 %939, %v51
    %v941 = vpop.permute.xlu0 %940
    %943 = vset.pattern.permute.xlu0 3
    %944 = vperm.xlu0 %943, %v52
    %v945 = vpop.permute.xlu0 %944
    %947 = vset.pattern.permute.xlu0 3
    %948 = vperm.xlu0 %947, %v53
    %v949 = vpop.permute.xlu0 %948
    %951 = vset.pattern.permute.xlu0 3
    %952 = vperm.xlu0 %951, %v54
    %v953 = vpop.permute.xlu0 %952
    %v955 = vmul.f32 %v907, %v925
    %v956 = vmul.f32 %v908, %v925
    %v957 = vmul.f32 %v909, %v929
    %v958 = vmul.f32 %v910, %v929
    %v959 = vmul.f32 %v911, %v933
    %v960 = vmul.f32 %v912, %v933
    %v961 = vmul.f32 %v913, %v937
    %v962 = vmul.f32 %v914, %v937
    %v963 = vmul.f32 %v915, %v941
    %v964 = vmul.f32 %v916, %v941
    %v965 = vmul.f32 %v917, %v945
    %v966 = vmul.f32 %v918, %v945
    %v967 = vmul.f32 %v919, %v949
    %v968 = vmul.f32 %v920, %v949
    %v969 = vmul.f32 %v921, %v953
    %v970 = vmul.f32 %v922, %v953
    %971 = vset.pattern.permute.xlu0 4
    %972 = vperm.xlu0 %971, %v47
    %v973 = vpop.permute.xlu0 %972
    %975 = vset.pattern.permute.xlu0 4
    %976 = vperm.xlu0 %975, %v48
    %v977 = vpop.permute.xlu0 %976
    %979 = vset.pattern.permute.xlu0 4
    %980 = vperm.xlu0 %979, %v49
    %v981 = vpop.permute.xlu0 %980
    %983 = vset.pattern.permute.xlu0 4
    %984 = vperm.xlu0 %983, %v50
    %v985 = vpop.permute.xlu0 %984
    %987 = vset.pattern.permute.xlu0 4
    %988 = vperm.xlu0 %987, %v51
    %v989 = vpop.permute.xlu0 %988
    %991 = vset.pattern.permute.xlu0 4
    %992 = vperm.xlu0 %991, %v52
    %v993 = vpop.permute.xlu0 %992
    %995 = vset.pattern.permute.xlu0 4
    %996 = vperm.xlu0 %995, %v53
    %v997 = vpop.permute.xlu0 %996
    %999 = vset.pattern.permute.xlu0 4
    %1000 = vperm.xlu0 %999, %v54
    %v1001 = vpop.permute.xlu0 %1000
    %v1003 = vadd.f32 %v955, %v973
    %v1004 = vadd.f32 %v956, %v973
    %v1005 = vadd.f32 %v957, %v977
    %v1006 = vadd.f32 %v958, %v977
    %v1007 = vadd.f32 %v959, %v981
    %v1008 = vadd.f32 %v960, %v981
    %v1009 = vadd.f32 %v961, %v985
    %v1010 = vadd.f32 %v962, %v985
    %v1011 = vadd.f32 %v963, %v989
    %v1012 = vadd.f32 %v964, %v989
    %v1013 = vadd.f32 %v965, %v993
    %v1014 = vadd.f32 %v966, %v993
    %v1015 = vadd.f32 %v967, %v997
    %v1016 = vadd.f32 %v968, %v997
    %v1017 = vadd.f32 %v969, %v1001
    %v1018 = vadd.f32 %v970, %v1001
    %v1019 = vmax.f32 %v1003, 0.0
    %v1020 = vmax.f32 %v1004, 0.0
    %v1021 = vmax.f32 %v1005, 0.0
    %v1022 = vmax.f32 %v1006, 0.0
    %v1023 = vmax.f32 %v1007, 0.0
    %v1024 = vmax.f32 %v1008, 0.0
    %v1025 = vmax.f32 %v1009, 0.0
    %v1026 = vmax.f32 %v1010, 0.0
    %v1027 = vmax.f32 %v1011, 0.0
    %v1028 = vmax.f32 %v1012, 0.0
    %v1029 = vmax.f32 %v1013, 0.0
    %v1030 = vmax.f32 %v1014, 0.0
    %v1031 = vmax.f32 %v1015, 0.0
    %v1032 = vmax.f32 %v1016, 0.0
    %v1033 = vmax.f32 %v1017, 0.0
    %v1034 = vmax.f32 %v1018, 0.0
    %v1036 = vsel %vm505, %v84, 0
    %v1039 = vsel %vm505, %v85, 0
    %v1042 = vsel %vm505, %v86, 0
    %v1045 = vsel %vm505, %v87, 0
    %1047 = vmatprep.subr.mxu0 0.0
    %1048 = vmatpush1.msra.mxu0 0.0
    %1049 = vmatprep.subr.mxu0 0.0
    %1050 = vmatpush1.msra.mxu0 0.0
    %1051 = vmatprep.subr.mxu0 0.0
    %1052 = vmatpush1.msra.mxu0 0.0
    %1053 = vmatprep.subr.mxu0 0.0
    %1054 = vmatpush1.msra.mxu0 0.0
    %1055 = vmatprep.subr.mxu0 0.0
    %1056 = vmatpush1.msra.mxu0 0.0
    %1057 = vmatprep.subr.mxu0 0.0
    %1058 = vmatpush1.msra.mxu0 0.0
    %1059 = vmatprep.subr.mxu0 0.0
    %1060 = vmatpush1.msra.mxu0 0.0
    %1061 = vmatprep.subr.mxu0 0.0
    %1062 = vmatpush1.msra.mxu0 0.0
    %1063 = vmatprep.subr.mxu0 %v1034
    %1064 = vmatpush1.msra.mxu0 %v1033
    %1065 = vmatprep.subr.mxu0 %v1032
    %1066 = vmatpush1.msra.mxu0 %v1031
    %1067 = vmatprep.subr.mxu0 %v1030
    %1068 = vmatpush1.msra.mxu0 %v1029
    %1069 = vmatprep.subr.mxu0 %v1028
    %1070 = vmatpush1.msra.mxu0 %v1027
    %1071 = vmatprep.subr.mxu0 %v1026
    %1072 = vmatpush1.msra.mxu0 %v1025
    %1073 = vmatprep.subr.mxu0 %v1024
    %1074 = vmatpush1.msra.mxu0 %v1023
    %1075 = vmatprep.subr.mxu0 %v1022
    %1076 = vmatpush1.msra.mxu0 %v1021
    %1077 = vmatprep.subr.mxu0 %v1020
    %1078 = vmatpush1.msra.mxu0 %v1019
    %1079 = vmatprep.subr.mxu0 0.0
    %1080 = vmatpush2.msra.mxu0 0.0
    %1081 = vmatprep.subr.mxu0 0.0
    %1082 = vmatpush2.msra.mxu0 0.0
    %1083 = vmatprep.subr.mxu0 0.0
    %1084 = vmatpush2.msra.mxu0 0.0
    %1085 = vmatprep.subr.mxu0 0.0
    %1086 = vmatpush2.msra.mxu0 0.0
    %1087 = vmatprep.subr.mxu0 0.0
    %1088 = vmatpush2.msra.mxu0 0.0
    %1089 = vmatprep.subr.mxu0 0.0
    %1090 = vmatpush2.msra.mxu0 0.0
    %1091 = vmatprep.subr.mxu0 0.0
    %1092 = vmatpush2.msra.mxu0 0.0
    %1093 = vmatprep.subr.mxu0 0.0
    %1094 = vmatpush2.msra.mxu0 0.0
    %1095 = vmatprep.subr.mxu0 0.0
    %1096 = vmatpush2.msra.mxu0 0.0
    %1097 = vmatprep.subr.mxu0 0.0
    %1098 = vmatpush2.msra.mxu0 0.0
    %1099 = vmatprep.subr.mxu0 0.0
    %1100 = vmatpush2.msra.mxu0 0.0
    %1101 = vmatprep.subr.mxu0 0.0
    %1102 = vmatpush2.msra.mxu0 0.0
    %1103 = vmatprep.subr.mxu0 0.0
    %1104 = vmatpush2.msra.mxu0 0.0
    %1105 = vmatprep.subr.mxu0 0.0
    %1106 = vmatpush2.msra.mxu0 0.0
    %1107 = vmatprep.subr.mxu0 0.0
    %1108 = vmatpush2.msra.mxu0 0.0
    %1109 = vmatprep.subr.mxu0 0.0
    %1110 = vmatpush2.msra.mxu0 0.0
    %1111 = vmatprep.mubr.f32.mxu0 0.0
    %1112 = vmatmul.mubr.f32.gmra.mxu0 %v1036
    %v1113 = vpop.f32.mrf.mxu0
    %v1114 = vadd.f32 0.0, %v1113
    %v1115 = vpop.f32.mrf.mxu0
    %v1116 = vadd.f32 0.0, %v1115
    %1117 = vmatprep.mubr.f32.mxu0 0.0
    %1118 = vmatmul.mubr.f32.gmra.mxu0 %v1039
    %v1119 = vpop.f32.mrf.mxu0
    %v1120 = vadd.f32 0.0, %v1119
    %v1121 = vpop.f32.mrf.mxu0
    %v1122 = vadd.f32 0.0, %v1121
    %1123 = vmatprep.mubr.f32.mxu0 0.0
    %1124 = vmatmul.mubr.f32.gmra.mxu0 %v1042
    %v1125 = vpop.f32.mrf.mxu0
    %v1126 = vadd.f32 0.0, %v1125
    %v1127 = vpop.f32.mrf.mxu0
    %v1128 = vadd.f32 0.0, %v1127
    %1129 = vmatprep.mubr.f32.mxu0 0.0
    %1130 = vmatmul.mubr.f32.gmra.mxu0 %v1045
    %v1131 = vpop.f32.mrf.mxu0
    %v1132 = vadd.f32 0.0, %v1131
    %v1133 = vpop.f32.mrf.mxu0
    %v1134 = vadd.f32 0.0, %v1133
    %1135 = vdwg.mxu0
    %v1136 = vadd.f32 %v1114, %v1120
    %v1137 = vadd.f32 %v1136, %v1126
    %v1138 = vadd.f32 %v1137, %v1132
    %v1139 = vrot.slane %v1138, 4
    %v1140 = vadd.f32 %v1138, %v1139
    %v1141 = vrot.slane %v1140, 2
    %v1142 = vadd.f32 %v1140, %v1141
    %v1143 = vrot.slane %v1142, 1
    %v1144 = vadd.f32 %v1142, %v1143
    %v1145 = vadd.f32 %v1116, %v1122
    %v1146 = vadd.f32 %v1145, %v1128
    %v1147 = vadd.f32 %v1146, %v1134
    %v1148 = vrot.slane %v1147, 4
    %v1149 = vadd.f32 %v1147, %v1148
    %v1150 = vrot.slane %v1149, 2
    %v1151 = vadd.f32 %v1149, %v1150
    %v1152 = vrot.slane %v1151, 1
    %v1153 = vadd.f32 %v1151, %v1152
    %v1154 = vmul.f32 %v1144, %v250
    %v1155 = vmul.f32 %v1153, %v250
    %v1156 = vmul.f32 %v1114, %v1114
    %v1157 = vmul.f32 %v1116, %v1116
    %v1158 = vmul.f32 %v1120, %v1120
    %v1159 = vmul.f32 %v1122, %v1122
    %v1160 = vmul.f32 %v1126, %v1126
    %v1161 = vmul.f32 %v1128, %v1128
    %v1162 = vmul.f32 %v1132, %v1132
    %v1163 = vmul.f32 %v1134, %v1134
    %v1164 = vadd.f32 %v1156, %v1158
    %v1165 = vadd.f32 %v1164, %v1160
    %v1166 = vadd.f32 %v1165, %v1162
    %v1167 = vrot.slane %v1166, 4
    %v1168 = vadd.f32 %v1166, %v1167
    %v1169 = vrot.slane %v1168, 2
    %v1170 = vadd.f32 %v1168, %v1169
    %v1171 = vrot.slane %v1170, 1
    %v1172 = vadd.f32 %v1170, %v1171
    %v1173 = vadd.f32 %v1157, %v1159
    %v1174 = vadd.f32 %v1173, %v1161
    %v1175 = vadd.f32 %v1174, %v1163
    %v1176 = vrot.slane %v1175, 4
    %v1177 = vadd.f32 %v1175, %v1176
    %v1178 = vrot.slane %v1177, 2
    %v1179 = vadd.f32 %v1177, %v1178
    %v1180 = vrot.slane %v1179, 1
    %v1181 = vadd.f32 %v1179, %v1180
    %v1182 = vmul.f32 %v1172, %v250
    %v1183 = vmul.f32 %v1181, %v250
    %v1184 = vmul.f32 %v1154, %v1154
    %v1185 = vmul.f32 %v1155, %v1155
    %v1186 = vsub.f32 %v1182, %v1184
    %v1187 = vsub.f32 %v1183, %v1185
    %v1188 = vmax.f32 %v1186, 0.0
    %v1189 = vmax.f32 %v1187, 0.0
    %v1190 = vsub.f32 %v1114, %v1154
    %v1191 = vsub.f32 %v1116, %v1155
    %v1192 = vsub.f32 %v1120, %v1154
    %v1193 = vsub.f32 %v1122, %v1155
    %v1194 = vsub.f32 %v1126, %v1154
    %v1195 = vsub.f32 %v1128, %v1155
    %v1196 = vsub.f32 %v1132, %v1154
    %v1197 = vsub.f32 %v1134, %v1155
    %v1198 = vadd.f32 %v1188, 1e-05
    %v1199 = vadd.f32 %v1189, 1e-05
    %v1200 = vrsqrt.pop %v1198
    %v1201 = vrsqrt.pop %v1199
    %v1202 = vmul.f32 %v1190, %v1200
    %v1203 = vmul.f32 %v1191, %v1201
    %v1204 = vmul.f32 %v1192, %v1200
    %v1205 = vmul.f32 %v1193, %v1201
    %v1206 = vmul.f32 %v1194, %v1200
    %v1207 = vmul.f32 %v1195, %v1201
    %v1208 = vmul.f32 %v1196, %v1200
    %v1209 = vmul.f32 %v1197, %v1201
    %1210 = vset.pattern.permute.xlu0 5
    %1211 = vperm.xlu0 %1210, %v47
    %v1212 = vpop.permute.xlu0 %1211
    %1214 = vset.pattern.permute.xlu0 5
    %1215 = vperm.xlu0 %1214, %v48
    %v1216 = vpop.permute.xlu0 %1215
    %1218 = vset.pattern.permute.xlu0 5
    %1219 = vperm.xlu0 %1218, %v49
    %v1220 = vpop.permute.xlu0 %1219
    %1222 = vset.pattern.permute.xlu0 5
    %1223 = vperm.xlu0 %1222, %v50
    %v1224 = vpop.permute.xlu0 %1223
    %v1226 = vmul.f32 %v1202, %v1212
    %v1227 = vmul.f32 %v1203, %v1212
    %v1228 = vmul.f32 %v1204, %v1216
    %v1229 = vmul.f32 %v1205, %v1216
    %v1230 = vmul.f32 %v1206, %v1220
    %v1231 = vmul.f32 %v1207, %v1220
    %v1232 = vmul.f32 %v1208, %v1224
    %v1233 = vmul.f32 %v1209, %v1224
    %1234 = vset.pattern.permute.xlu0 6
    %1235 = vperm.xlu0 %1234, %v47
    %v1236 = vpop.permute.xlu0 %1235
    %1238 = vset.pattern.permute.xlu0 6
    %1239 = vperm.xlu0 %1238, %v48
    %v1240 = vpop.permute.xlu0 %1239
    %1242 = vset.pattern.permute.xlu0 6
    %1243 = vperm.xlu0 %1242, %v49
    %v1244 = vpop.permute.xlu0 %1243
    %1246 = vset.pattern.permute.xlu0 6
    %1247 = vperm.xlu0 %1246, %v50
    %v1248 = vpop.permute.xlu0 %1247
    %v1250 = vadd.f32 %v1226, %v1236
    %v1251 = vadd.f32 %v1227, %v1236
    %v1252 = vadd.f32 %v1228, %v1240
    %v1253 = vadd.f32 %v1229, %v1240
    %v1254 = vadd.f32 %v1230, %v1244
    %v1255 = vadd.f32 %v1231, %v1244
    %v1256 = vadd.f32 %v1232, %v1248
    %v1257 = vadd.f32 %v1233, %v1248
    %v1258 = vmax.f32 %v1250, 0.0
    %v1259 = vmax.f32 %v1251, 0.0
    %v1260 = vmax.f32 %v1252, 0.0
    %v1261 = vmax.f32 %v1253, 0.0
    %v1262 = vmax.f32 %v1254, 0.0
    %v1263 = vmax.f32 %v1255, 0.0
    %v1264 = vmax.f32 %v1256, 0.0
    %v1265 = vmax.f32 %v1257, 0.0
    %1267 = vset.pattern.permute.xlu0 7
    %1268 = vperm.xlu0 %1267, %v55
    %v1269 = vpop.permute.xlu0 %1268
    %v1272 = vsel %vm367, %v88, 0
    %1274 = vmatprep.subr.mxu0 0.0
    %1275 = vmatpush1.msra.mxu0 0.0
    %1276 = vmatprep.subr.mxu0 0.0
    %1277 = vmatpush1.msra.mxu0 0.0
    %1278 = vmatprep.subr.mxu0 0.0
    %1279 = vmatpush1.msra.mxu0 0.0
    %1280 = vmatprep.subr.mxu0 0.0
    %1281 = vmatpush1.msra.mxu0 0.0
    %1282 = vmatprep.subr.mxu0 0.0
    %1283 = vmatpush1.msra.mxu0 0.0
    %1284 = vmatprep.subr.mxu0 0.0
    %1285 = vmatpush1.msra.mxu0 0.0
    %1286 = vmatprep.subr.mxu0 0.0
    %1287 = vmatpush1.msra.mxu0 0.0
    %1288 = vmatprep.subr.mxu0 0.0
    %1289 = vmatpush1.msra.mxu0 0.0
    %1290 = vmatprep.subr.mxu0 0.0
    %1291 = vmatpush1.msra.mxu0 0.0
    %1292 = vmatprep.subr.mxu0 0.0
    %1293 = vmatpush1.msra.mxu0 0.0
    %1294 = vmatprep.subr.mxu0 0.0
    %1295 = vmatpush1.msra.mxu0 0.0
    %1296 = vmatprep.subr.mxu0 0.0
    %1297 = vmatpush1.msra.mxu0 0.0
    %1298 = vmatprep.subr.mxu0 %v1265
    %1299 = vmatpush1.msra.mxu0 %v1264
    %1300 = vmatprep.subr.mxu0 %v1263
    %1301 = vmatpush1.msra.mxu0 %v1262
    %1302 = vmatprep.subr.mxu0 %v1261
    %1303 = vmatpush1.msra.mxu0 %v1260
    %1304 = vmatprep.subr.mxu0 %v1259
    %1305 = vmatpush1.msra.mxu0 %v1258
    %1306 = vmatprep.subr.mxu0 0.0
    %1307 = vmatpush2.msra.mxu0 0.0
    %1308 = vmatprep.subr.mxu0 0.0
    %1309 = vmatpush2.msra.mxu0 0.0
    %1310 = vmatprep.subr.mxu0 0.0
    %1311 = vmatpush2.msra.mxu0 0.0
    %1312 = vmatprep.subr.mxu0 0.0
    %1313 = vmatpush2.msra.mxu0 0.0
    %1314 = vmatprep.subr.mxu0 0.0
    %1315 = vmatpush2.msra.mxu0 0.0
    %1316 = vmatprep.subr.mxu0 0.0
    %1317 = vmatpush2.msra.mxu0 0.0
    %1318 = vmatprep.subr.mxu0 0.0
    %1319 = vmatpush2.msra.mxu0 0.0
    %1320 = vmatprep.subr.mxu0 0.0
    %1321 = vmatpush2.msra.mxu0 0.0
    %1322 = vmatprep.subr.mxu0 0.0
    %1323 = vmatpush2.msra.mxu0 0.0
    %1324 = vmatprep.subr.mxu0 0.0
    %1325 = vmatpush2.msra.mxu0 0.0
    %1326 = vmatprep.subr.mxu0 0.0
    %1327 = vmatpush2.msra.mxu0 0.0
    %1328 = vmatprep.subr.mxu0 0.0
    %1329 = vmatpush2.msra.mxu0 0.0
    %1330 = vmatprep.subr.mxu0 0.0
    %1331 = vmatpush2.msra.mxu0 0.0
    %1332 = vmatprep.subr.mxu0 0.0
    %1333 = vmatpush2.msra.mxu0 0.0
    %1334 = vmatprep.subr.mxu0 0.0
    %1335 = vmatpush2.msra.mxu0 0.0
    %1336 = vmatprep.subr.mxu0 0.0
    %1337 = vmatpush2.msra.mxu0 0.0
    %1338 = vmatprep.mubr.f32.mxu0 0.0
    %1339 = vmatmul.mubr.f32.gmra.mxu0 %v1272
    %v1340 = vpop.f32.mrf.mxu0
    %v1341 = vadd.f32 %v1269, %v1340
    %v1342 = vpop.f32.mrf.mxu0
    %v1343 = vadd.f32 %v1269, %v1342
    %1344 = vdwg.mxu0
    %v1347 = vcombine.low %v1341, %v1343
    %v1349 = vunpack.c.l.s4 1966171168
    %v1350 = vunpack.c.0.s8 %v1349
    %v1351 = vlaneseq
    %v1352 = vshrl.u32 %v1351, 7
    %v1353 = vsub.s32 %v1350, %v1352
    %v1354 = vrot.slane %v1347, %v1353
    %v1356 = vunpack.c.l.s4 1966171168
    %v1357 = vunpack.c.0.s8 %v1356
    %v1358 = vlaneseq
    %v1359 = vshrl.u32 %v1358, 7
    %v1360 = vsub.s32 %v1357, %v1359
    %v1361 = vrot.slane %v1354, %v1360
    %v1363 = vlaneseq
    %vm1364 = vcmp.ge.s32.totalorder %v1363, 0
    %vm1365 = vcmp.lt.s32.totalorder %v1363, 256
    %vm1366 = vmand %vm1364, %vm1365
    %1367 = vst.msk [vmem:[#allocation5] sm:$0x3] %vm1366, %v1361
    %s1368 = scalar_lea.vmem [#allocation2], 256
    %v1369 = vld [vmem:[%s1368] sm:$0xff]
    %v1370 = vld [vmem:[%s1368 + $0x8] sm:$0xff]
    %v1371 = vld [vmem:[%s1368 + $0x10] sm:$0xff]
    %v1372 = vld [vmem:[%s1368 + $0x18] sm:$0xff]
    %v1373 = vld [vmem:[%s1368 + $0x20] sm:$0xff]
    %v1374 = vld [vmem:[%s1368 + $0x28] sm:$0xff]
    %v1375 = vld [vmem:[%s1368 + $0x30] sm:$0xff]
    %v1376 = vld [vmem:[%s1368 + $0x38] sm:$0xff]
    %v1377 = vld [vmem:[%s1368 + $0x40] sm:$0xff]
    %v1378 = vld [vmem:[%s1368 + $0x48] sm:$0xff]
    %v1379 = vld [vmem:[%s1368 + $0x50] sm:$0xff]
    %v1380 = vld [vmem:[%s1368 + $0x58] sm:$0xff]
    %v1381 = vld [vmem:[%s1368 + $0x60] sm:$0xff]
    %v1382 = vld [vmem:[%s1368 + $0x68] sm:$0xff]
    %v1383 = vld [vmem:[%s1368 + $0x70] sm:$0xff]
    %v1384 = vld [vmem:[%s1368 + $0x78] sm:$0xff]
    %v1385 = vld [vmem:[%s1368 + $0x80] sm:$0xff]
    %v1386 = vld [vmem:[%s1368 + $0x88] sm:$0xff]
    %v1387 = vld [vmem:[%s1368 + $0x90] sm:$0xff]
    %v1388 = vld [vmem:[%s1368 + $0x98] sm:$0xff]
    %v1389 = vld [vmem:[%s1368 + $0xa0] sm:$0xff]
    %v1390 = vld [vmem:[%s1368 + $0xa8] sm:$0xff]
    %v1391 = vld [vmem:[%s1368 + $0xb0] sm:$0xff]
    %v1392 = vld [vmem:[%s1368 + $0xb8] sm:$0xff]
    %v1393 = vld [vmem:[%s1368 + $0xc0] sm:$0xff]
    %v1394 = vld [vmem:[%s1368 + $0xc8] sm:$0xff]
    %v1395 = vld [vmem:[%s1368 + $0xd0] sm:$0xff]
    %v1396 = vld [vmem:[%s1368 + $0xd8] sm:$0xff]
    %v1397 = vld [vmem:[%s1368 + $0xe0] sm:$0xff]
    %v1398 = vld [vmem:[%s1368 + $0xe8] sm:$0xff]
    %v1399 = vld [vmem:[%s1368 + $0xf0] sm:$0xff]
    %v1400 = vld [vmem:[%s1368 + $0xf8] sm:$0xff]
    %s1401 = scalar_lea.vmem %s1, 16
    %v1402 = vld [vmem:[%s1401] sm:$0x7f]
    %v1403 = vld [vmem:[%s1401 + $0x8] sm:$0x7f]
    %v1405 = vsel %vm136, %v1402, 0
    %v1408 = vsel %vm136, %v1403, 0
    %1410 = vmatprep.subr.mxu0 0.0
    %1411 = vmatpush1.msra.mxu0 0.0
    %1412 = vmatprep.subr.mxu0 0.0
    %1413 = vmatpush1.msra.mxu0 0.0
    %1414 = vmatprep.subr.mxu0 0.0
    %1415 = vmatpush1.msra.mxu0 0.0
    %1416 = vmatprep.subr.mxu0 0.0
    %1417 = vmatpush1.msra.mxu0 0.0
    %1418 = vmatprep.subr.mxu0 0.0
    %1419 = vmatpush1.msra.mxu0 0.0
    %1420 = vmatprep.subr.mxu0 0.0
    %1421 = vmatpush1.msra.mxu0 0.0
    %1422 = vmatprep.subr.mxu0 0.0
    %1423 = vmatpush1.msra.mxu0 0.0
    %1424 = vmatprep.subr.mxu0 0.0
    %1425 = vmatpush1.msra.mxu0 0.0
    %1426 = vmatprep.subr.mxu0 0.0
    %1427 = vmatpush1.msra.mxu0 0.0
    %1428 = vmatprep.subr.mxu0 0.0
    %1429 = vmatpush1.msra.mxu0 0.0
    %1430 = vmatprep.subr.mxu0 0.0
    %1431 = vmatpush1.msra.mxu0 0.0
    %1432 = vmatprep.subr.mxu0 0.0
    %1433 = vmatpush1.msra.mxu0 0.0
    %1434 = vmatprep.subr.mxu0 0.0
    %1435 = vmatpush1.msra.mxu0 0.0
    %1436 = vmatprep.subr.mxu0 0.0
    %1437 = vmatpush1.msra.mxu0 0.0
    %1438 = vmatprep.subr.mxu0 0.0
    %1439 = vmatpush1.msra.mxu0 0.0
    %1440 = vmatprep.subr.mxu0 %v1408
    %1441 = vmatpush1.msra.mxu0 %v1405
    %1442 = vmatprep.subr.mxu0 0.0
    %1443 = vmatpush2.msra.mxu0 0.0
    %1444 = vmatprep.subr.mxu0 0.0
    %1445 = vmatpush2.msra.mxu0 0.0
    %1446 = vmatprep.subr.mxu0 0.0
    %1447 = vmatpush2.msra.mxu0 0.0
    %1448 = vmatprep.subr.mxu0 0.0
    %1449 = vmatpush2.msra.mxu0 0.0
    %1450 = vmatprep.subr.mxu0 0.0
    %1451 = vmatpush2.msra.mxu0 0.0
    %1452 = vmatprep.subr.mxu0 0.0
    %1453 = vmatpush2.msra.mxu0 0.0
    %1454 = vmatprep.subr.mxu0 0.0
    %1455 = vmatpush2.msra.mxu0 0.0
    %1456 = vmatprep.subr.mxu0 0.0
    %1457 = vmatpush2.msra.mxu0 0.0
    %1458 = vmatprep.subr.mxu0 0.0
    %1459 = vmatpush2.msra.mxu0 0.0
    %1460 = vmatprep.subr.mxu0 0.0
    %1461 = vmatpush2.msra.mxu0 0.0
    %1462 = vmatprep.subr.mxu0 0.0
    %1463 = vmatpush2.msra.mxu0 0.0
    %1464 = vmatprep.subr.mxu0 0.0
    %1465 = vmatpush2.msra.mxu0 0.0
    %1466 = vmatprep.subr.mxu0 0.0
    %1467 = vmatpush2.msra.mxu0 0.0
    %1468 = vmatprep.subr.mxu0 0.0
    %1469 = vmatpush2.msra.mxu0 0.0
    %1470 = vmatprep.subr.mxu0 0.0
    %1471 = vmatpush2.msra.mxu0 0.0
    %1472 = vmatprep.subr.mxu0 0.0
    %1473 = vmatpush2.msra.mxu0 0.0
    %1474 = vmatprep.mubr.f32.mxu0 0.0
    %1475 = vmatmul.mubr.f32.gmra.mxu0 %v125
    %v1476 = vpop.f32.mrf.mxu0
    %v1477 = vadd.f32 0.0, %v1476
    %v1478 = vpop.f32.mrf.mxu0
    %v1479 = vadd.f32 0.0, %v1478
    %1480 = vmatprep.mubr.f32.mxu0 0.0
    %1481 = vmatmul.mubr.f32.gmra.mxu0 %v128
    %v1482 = vpop.f32.mrf.mxu0
    %v1483 = vadd.f32 0.0, %v1482
    %v1484 = vpop.f32.mrf.mxu0
    %v1485 = vadd.f32 0.0, %v1484
    %1486 = vmatprep.mubr.f32.mxu0 0.0
    %1487 = vmatmul.mubr.f32.gmra.mxu0 %v131
    %v1488 = vpop.f32.mrf.mxu0
    %v1489 = vadd.f32 0.0, %v1488
    %v1490 = vpop.f32.mrf.mxu0
    %v1491 = vadd.f32 0.0, %v1490
    %1492 = vmatprep.mubr.f32.mxu0 0.0
    %1493 = vmatmul.mubr.f32.gmra.mxu0 %v134
    %v1494 = vpop.f32.mrf.mxu0
    %v1495 = vadd.f32 0.0, %v1494
    %v1496 = vpop.f32.mrf.mxu0
    %v1497 = vadd.f32 0.0, %v1496
    %1498 = vdwg.mxu0
    %v1499 = vadd.f32 %v1477, %v1483
    %v1500 = vadd.f32 %v1499, %v1489
    %v1501 = vadd.f32 %v1500, %v1495
    %v1502 = vrot.slane %v1501, 4
    %v1503 = vadd.f32 %v1501, %v1502
    %v1504 = vrot.slane %v1503, 2
    %v1505 = vadd.f32 %v1503, %v1504
    %v1506 = vrot.slane %v1505, 1
    %v1507 = vadd.f32 %v1505, %v1506
    %v1508 = vadd.f32 %v1479, %v1485
    %v1509 = vadd.f32 %v1508, %v1491
    %v1510 = vadd.f32 %v1509, %v1497
    %v1511 = vrot.slane %v1510, 4
    %v1512 = vadd.f32 %v1510, %v1511
    %v1513 = vrot.slane %v1512, 2
    %v1514 = vadd.f32 %v1512, %v1513
    %v1515 = vrot.slane %v1514, 1
    %v1516 = vadd.f32 %v1514, %v1515
    %v1517 = vmul.f32 %v1507, %v250
    %v1518 = vmul.f32 %v1516, %v250
    %v1519 = vmul.f32 %v1477, %v1477
    %v1520 = vmul.f32 %v1479, %v1479
    %v1521 = vmul.f32 %v1483, %v1483
    %v1522 = vmul.f32 %v1485, %v1485
    %v1523 = vmul.f32 %v1489, %v1489
    %v1524 = vmul.f32 %v1491, %v1491
    %v1525 = vmul.f32 %v1495, %v1495
    %v1526 = vmul.f32 %v1497, %v1497
    %v1527 = vadd.f32 %v1519, %v1521
    %v1528 = vadd.f32 %v1527, %v1523
    %v1529 = vadd.f32 %v1528, %v1525
    %v1530 = vrot.slane %v1529, 4
    %v1531 = vadd.f32 %v1529, %v1530
    %v1532 = vrot.slane %v1531, 2
    %v1533 = vadd.f32 %v1531, %v1532
    %v1534 = vrot.slane %v1533, 1
    %v1535 = vadd.f32 %v1533, %v1534
    %v1536 = vadd.f32 %v1520, %v1522
    %v1537 = vadd.f32 %v1536, %v1524
    %v1538 = vadd.f32 %v1537, %v1526
    %v1539 = vrot.slane %v1538, 4
    %v1540 = vadd.f32 %v1538, %v1539
    %v1541 = vrot.slane %v1540, 2
    %v1542 = vadd.f32 %v1540, %v1541
    %v1543 = vrot.slane %v1542, 1
    %v1544 = vadd.f32 %v1542, %v1543
    %v1545 = vmul.f32 %v1535, %v250
    %v1546 = vmul.f32 %v1544, %v250
    %v1547 = vmul.f32 %v1517, %v1517
    %v1548 = vmul.f32 %v1518, %v1518
    %v1549 = vsub.f32 %v1545, %v1547
    %v1550 = vsub.f32 %v1546, %v1548
    %v1551 = vmax.f32 %v1549, 0.0
    %v1552 = vmax.f32 %v1550, 0.0
    %v1553 = vsub.f32 %v1477, %v1517
    %v1554 = vsub.f32 %v1479, %v1518
    %v1555 = vsub.f32 %v1483, %v1517
    %v1556 = vsub.f32 %v1485, %v1518
    %v1557 = vsub.f32 %v1489, %v1517
    %v1558 = vsub.f32 %v1491, %v1518
    %v1559 = vsub.f32 %v1495, %v1517
    %v1560 = vsub.f32 %v1497, %v1518
    %v1561 = vadd.f32 %v1551, 1e-05
    %v1562 = vadd.f32 %v1552, 1e-05
    %v1563 = vrsqrt.pop %v1561
    %v1564 = vrsqrt.pop %v1562
    %v1565 = vmul.f32 %v1553, %v1563
    %v1566 = vmul.f32 %v1554, %v1564
    %v1567 = vmul.f32 %v1555, %v1563
    %v1568 = vmul.f32 %v1556, %v1564
    %v1569 = vmul.f32 %v1557, %v1563
    %v1570 = vmul.f32 %v1558, %v1564
    %v1571 = vmul.f32 %v1559, %v1563
    %v1572 = vmul.f32 %v1560, %v1564
    %v1573 = vmul.f32 %v1565, %v310
    %v1574 = vmul.f32 %v1566, %v310
    %v1575 = vmul.f32 %v1567, %v315
    %v1576 = vmul.f32 %v1568, %v315
    %v1577 = vmul.f32 %v1569, %v320
    %v1578 = vmul.f32 %v1570, %v320
    %v1579 = vmul.f32 %v1571, %v325
    %v1580 = vmul.f32 %v1572, %v325
    %v1581 = vadd.f32 %v1573, %v337
    %v1582 = vadd.f32 %v1574, %v337
    %v1583 = vadd.f32 %v1575, %v341
    %v1584 = vadd.f32 %v1576, %v341
    %v1585 = vadd.f32 %v1577, %v345
    %v1586 = vadd.f32 %v1578, %v345
    %v1587 = vadd.f32 %v1579, %v349
    %v1588 = vadd.f32 %v1580, %v349
    %v1589 = vmax.f32 %v1581, 0.0
    %v1590 = vmax.f32 %v1582, 0.0
    %v1591 = vmax.f32 %v1583, 0.0
    %v1592 = vmax.f32 %v1584, 0.0
    %v1593 = vmax.f32 %v1585, 0.0
    %v1594 = vmax.f32 %v1586, 0.0
    %v1595 = vmax.f32 %v1587, 0.0
    %v1596 = vmax.f32 %v1588, 0.0
    %1597 = vmatprep.subr.mxu0 0.0
    %1598 = vmatpush1.msra.mxu0 0.0
    %1599 = vmatprep.subr.mxu0 0.0
    %1600 = vmatpush1.msra.mxu0 0.0
    %1601 = vmatprep.subr.mxu0 0.0
    %1602 = vmatpush1.msra.mxu0 0.0
    %1603 = vmatprep.subr.mxu0 0.0
    %1604 = vmatpush1.msra.mxu0 0.0
    %1605 = vmatprep.subr.mxu0 0.0
    %1606 = vmatpush1.msra.mxu0 0.0
    %1607 = vmatprep.subr.mxu0 0.0
    %1608 = vmatpush1.msra.mxu0 0.0
    %1609 = vmatprep.subr.mxu0 0.0
    %1610 = vmatpush1.msra.mxu0 0.0
    %1611 = vmatprep.subr.mxu0 0.0
    %1612 = vmatpush1.msra.mxu0 0.0
    %1613 = vmatprep.subr.mxu0 0.0
    %1614 = vmatpush1.msra.mxu0 0.0
    %1615 = vmatprep.subr.mxu0 0.0
    %1616 = vmatpush1.msra.mxu0 0.0
    %1617 = vmatprep.subr.mxu0 0.0
    %1618 = vmatpush1.msra.mxu0 0.0
    %1619 = vmatprep.subr.mxu0 0.0
    %1620 = vmatpush1.msra.mxu0 0.0
    %1621 = vmatprep.subr.mxu0 %v1596
    %1622 = vmatpush1.msra.mxu0 %v1595
    %1623 = vmatprep.subr.mxu0 %v1594
    %1624 = vmatpush1.msra.mxu0 %v1593
    %1625 = vmatprep.subr.mxu0 %v1592
    %1626 = vmatpush1.msra.mxu0 %v1591
    %1627 = vmatprep.subr.mxu0 %v1590
    %1628 = vmatpush1.msra.mxu0 %v1589
    %1629 = vmatprep.subr.mxu0 0.0
    %1630 = vmatpush2.msra.mxu0 0.0
    %1631 = vmatprep.subr.mxu0 0.0
    %1632 = vmatpush2.msra.mxu0 0.0
    %1633 = vmatprep.subr.mxu0 0.0
    %1634 = vmatpush2.msra.mxu0 0.0
    %1635 = vmatprep.subr.mxu0 0.0
    %1636 = vmatpush2.msra.mxu0 0.0
    %1637 = vmatprep.subr.mxu0 0.0
    %1638 = vmatpush2.msra.mxu0 0.0
    %1639 = vmatprep.subr.mxu0 0.0
    %1640 = vmatpush2.msra.mxu0 0.0
    %1641 = vmatprep.subr.mxu0 0.0
    %1642 = vmatpush2.msra.mxu0 0.0
    %1643 = vmatprep.subr.mxu0 0.0
    %1644 = vmatpush2.msra.mxu0 0.0
    %1645 = vmatprep.subr.mxu0 0.0
    %1646 = vmatpush2.msra.mxu0 0.0
    %1647 = vmatprep.subr.mxu0 0.0
    %1648 = vmatpush2.msra.mxu0 0.0
    %1649 = vmatprep.subr.mxu0 0.0
    %1650 = vmatpush2.msra.mxu0 0.0
    %1651 = vmatprep.subr.mxu0 0.0
    %1652 = vmatpush2.msra.mxu0 0.0
    %1653 = vmatprep.subr.mxu0 0.0
    %1654 = vmatpush2.msra.mxu0 0.0
    %1655 = vmatprep.subr.mxu0 0.0
    %1656 = vmatpush2.msra.mxu0 0.0
    %1657 = vmatprep.subr.mxu0 0.0
    %1658 = vmatpush2.msra.mxu0 0.0
    %1659 = vmatprep.subr.mxu0 0.0
    %1660 = vmatpush2.msra.mxu0 0.0
    %1661 = vmatprep.mubr.f32.mxu0 0.0
    %1662 = vmatmul.mubr.f32.gmra.mxu0 %v369
    %v1663 = vpop.f32.mrf.mxu0
    %v1664 = vadd.f32 0.0, %v1663
    %v1665 = vpop.f32.mrf.mxu0
    %v1666 = vadd.f32 0.0, %v1665
    %1667 = vmatprep.mubr.f32.mxu0 0.0
    %1668 = vmatmul.mubr.f32.gmra.mxu0 %v372
    %v1669 = vpop.f32.mrf.mxu0
    %v1670 = vadd.f32 0.0, %v1669
    %v1671 = vpop.f32.mrf.mxu0
    %v1672 = vadd.f32 0.0, %v1671
    %1673 = vmatprep.mubr.f32.mxu0 0.0
    %1674 = vmatmul.mubr.f32.gmra.mxu0 %v375
    %v1675 = vpop.f32.mrf.mxu0
    %v1676 = vadd.f32 0.0, %v1675
    %v1677 = vpop.f32.mrf.mxu0
    %v1678 = vadd.f32 0.0, %v1677
    %1679 = vmatprep.mubr.f32.mxu0 0.0
    %1680 = vmatmul.mubr.f32.gmra.mxu0 %v378
    %v1681 = vpop.f32.mrf.mxu0
    %v1682 = vadd.f32 0.0, %v1681
    %v1683 = vpop.f32.mrf.mxu0
    %v1684 = vadd.f32 0.0, %v1683
    %1685 = vmatprep.mubr.f32.mxu0 0.0
    %1686 = vmatmul.mubr.f32.gmra.mxu0 %v381
    %v1687 = vpop.f32.mrf.mxu0
    %v1688 = vadd.f32 0.0, %v1687
    %v1689 = vpop.f32.mrf.mxu0
    %v1690 = vadd.f32 0.0, %v1689
    %1691 = vmatprep.mubr.f32.mxu0 0.0
    %1692 = vmatmul.mubr.f32.gmra.mxu0 %v384
    %v1693 = vpop.f32.mrf.mxu0
    %v1694 = vadd.f32 0.0, %v1693
    %v1695 = vpop.f32.mrf.mxu0
    %v1696 = vadd.f32 0.0, %v1695
    %1697 = vmatprep.mubr.f32.mxu0 0.0
    %1698 = vmatmul.mubr.f32.gmra.mxu0 %v387
    %v1699 = vpop.f32.mrf.mxu0
    %v1700 = vadd.f32 0.0, %v1699
    %v1701 = vpop.f32.mrf.mxu0
    %v1702 = vadd.f32 0.0, %v1701
    %1703 = vmatprep.mubr.f32.mxu0 0.0
    %1704 = vmatmul.mubr.f32.gmra.mxu0 %v390
    %v1705 = vpop.f32.mrf.mxu0
    %v1706 = vadd.f32 0.0, %v1705
    %v1707 = vpop.f32.mrf.mxu0
    %v1708 = vadd.f32 0.0, %v1707
    %1709 = vdwg.mxu0
    %1710 = vmatprep.subr.mxu0 0.0
    %1711 = vmatpush1.msra.mxu0 0.0
    %1712 = vmatprep.subr.mxu0 0.0
    %1713 = vmatpush1.msra.mxu0 0.0
    %1714 = vmatprep.subr.mxu0 0.0
    %1715 = vmatpush1.msra.mxu0 0.0
    %1716 = vmatprep.subr.mxu0 0.0
    %1717 = vmatpush1.msra.mxu0 0.0
    %1718 = vmatprep.subr.mxu0 0.0
    %1719 = vmatpush1.msra.mxu0 0.0
    %1720 = vmatprep.subr.mxu0 0.0
    %1721 = vmatpush1.msra.mxu0 0.0
    %1722 = vmatprep.subr.mxu0 0.0
    %1723 = vmatpush1.msra.mxu0 0.0
    %1724 = vmatprep.subr.mxu0 0.0
    %1725 = vmatpush1.msra.mxu0 0.0
    %1726 = vmatprep.subr.mxu0 %v1708
    %1727 = vmatpush1.msra.mxu0 %v1706
    %1728 = vmatprep.subr.mxu0 %v1702
    %1729 = vmatpush1.msra.mxu0 %v1700
    %1730 = vmatprep.subr.mxu0 %v1696
    %1731 = vmatpush1.msra.mxu0 %v1694
    %1732 = vmatprep.subr.mxu0 %v1690
    %1733 = vmatpush1.msra.mxu0 %v1688
    %1734 = vmatprep.subr.mxu0 %v1684
    %1735 = vmatpush1.msra.mxu0 %v1682
    %1736 = vmatprep.subr.mxu0 %v1678
    %1737 = vmatpush1.msra.mxu0 %v1676
    %1738 = vmatprep.subr.mxu0 %v1672
    %1739 = vmatpush1.msra.mxu0 %v1670
    %1740 = vmatprep.subr.mxu0 %v1666
    %1741 = vmatpush1.msra.mxu0 %v1664
    %1742 = vmatprep.subr.mxu0 0.0
    %1743 = vmatpush2.msra.mxu0 0.0
    %1744 = vmatprep.subr.mxu0 0.0
    %1745 = vmatpush2.msra.mxu0 0.0
    %1746 = vmatprep.subr.mxu0 0.0
    %1747 = vmatpush2.msra.mxu0 0.0
    %1748 = vmatprep.subr.mxu0 0.0
    %1749 = vmatpush2.msra.mxu0 0.0
    %1750 = vmatprep.subr.mxu0 0.0
    %1751 = vmatpush2.msra.mxu0 0.0
    %1752 = vmatprep.subr.mxu0 0.0
    %1753 = vmatpush2.msra.mxu0 0.0
    %1754 = vmatprep.subr.mxu0 0.0
    %1755 = vmatpush2.msra.mxu0 0.0
    %1756 = vmatprep.subr.mxu0 0.0
    %1757 = vmatpush2.msra.mxu0 0.0
    %1758 = vmatprep.subr.mxu0 0.0
    %1759 = vmatpush2.msra.mxu0 0.0
    %1760 = vmatprep.subr.mxu0 0.0
    %1761 = vmatpush2.msra.mxu0 0.0
    %1762 = vmatprep.subr.mxu0 0.0
    %1763 = vmatpush2.msra.mxu0 0.0
    %1764 = vmatprep.subr.mxu0 0.0
    %1765 = vmatpush2.msra.mxu0 0.0
    %1766 = vmatprep.subr.mxu0 0.0
    %1767 = vmatpush2.msra.mxu0 0.0
    %1768 = vmatprep.subr.mxu0 0.0
    %1769 = vmatpush2.msra.mxu0 0.0
    %1770 = vmatprep.subr.mxu0 0.0
    %1771 = vmatpush2.msra.mxu0 0.0
    %1772 = vmatprep.subr.mxu0 0.0
    %1773 = vmatpush2.msra.mxu0 0.0
    %1774 = vmatprep.mubr.f32.mxu0 0.0
    %1775 = vmatmul.mubr.f32.gmra.mxu0 %v507
    %v1776 = vpop.f32.mrf.mxu0
    %v1777 = vadd.f32 0.0, %v1776
    %v1778 = vpop.f32.mrf.mxu0
    %v1779 = vadd.f32 0.0, %v1778
    %1780 = vmatprep.mubr.f32.mxu0 0.0
    %1781 = vmatmul.mubr.f32.gmra.mxu0 %v510
    %v1782 = vpop.f32.mrf.mxu0
    %v1783 = vadd.f32 0.0, %v1782
    %v1784 = vpop.f32.mrf.mxu0
    %v1785 = vadd.f32 0.0, %v1784
    %1786 = vmatprep.mubr.f32.mxu0 0.0
    %1787 = vmatmul.mubr.f32.gmra.mxu0 %v513
    %v1788 = vpop.f32.mrf.mxu0
    %v1789 = vadd.f32 0.0, %v1788
    %v1790 = vpop.f32.mrf.mxu0
    %v1791 = vadd.f32 0.0, %v1790
    %1792 = vmatprep.mubr.f32.mxu0 0.0
    %1793 = vmatmul.mubr.f32.gmra.mxu0 %v516
    %v1794 = vpop.f32.mrf.mxu0
    %v1795 = vadd.f32 0.0, %v1794
    %v1796 = vpop.f32.mrf.mxu0
    %v1797 = vadd.f32 0.0, %v1796
    %1798 = vmatprep.mubr.f32.mxu0 0.0
    %1799 = vmatmul.mubr.f32.gmra.mxu0 %v519
    %v1800 = vpop.f32.mrf.mxu0
    %v1801 = vadd.f32 0.0, %v1800
    %v1802 = vpop.f32.mrf.mxu0
    %v1803 = vadd.f32 0.0, %v1802
    %1804 = vmatprep.mubr.f32.mxu0 0.0
    %1805 = vmatmul.mubr.f32.gmra.mxu0 %v522
    %v1806 = vpop.f32.mrf.mxu0
    %v1807 = vadd.f32 0.0, %v1806
    %v1808 = vpop.f32.mrf.mxu0
    %v1809 = vadd.f32 0.0, %v1808
    %1810 = vmatprep.mubr.f32.mxu0 0.0
    %1811 = vmatmul.mubr.f32.gmra.mxu0 %v525
    %v1812 = vpop.f32.mrf.mxu0
    %v1813 = vadd.f32 0.0, %v1812
    %v1814 = vpop.f32.mrf.mxu0
    %v1815 = vadd.f32 0.0, %v1814
    %1816 = vmatprep.mubr.f32.mxu0 0.0
    %1817 = vmatmul.mubr.f32.gmra.mxu0 %v528
    %v1818 = vpop.f32.mrf.mxu0
    %v1819 = vadd.f32 0.0, %v1818
    %v1820 = vpop.f32.mrf.mxu0
    %v1821 = vadd.f32 0.0, %v1820
    %1822 = vdwg.mxu0
    %1823 = vmatprep.subr.mxu0 %v1400
    %1824 = vmatpush1.msra.mxu0 %v1399
    %1825 = vmatprep.subr.mxu0 %v1398
    %1826 = vmatpush1.msra.mxu0 %v1397
    %1827 = vmatprep.subr.mxu0 %v1396
    %1828 = vmatpush1.msra.mxu0 %v1395
    %1829 = vmatprep.subr.mxu0 %v1394
    %1830 = vmatpush1.msra.mxu0 %v1393
    %1831 = vmatprep.subr.mxu0 %v1392
    %1832 = vmatpush1.msra.mxu0 %v1391
    %1833 = vmatprep.subr.mxu0 %v1390
    %1834 = vmatpush1.msra.mxu0 %v1389
    %1835 = vmatprep.subr.mxu0 %v1388
    %1836 = vmatpush1.msra.mxu0 %v1387
    %1837 = vmatprep.subr.mxu0 %v1386
    %1838 = vmatpush1.msra.mxu0 %v1385
    %1839 = vmatprep.subr.mxu0 %v1384
    %1840 = vmatpush1.msra.mxu0 %v1383
    %1841 = vmatprep.subr.mxu0 %v1382
    %1842 = vmatpush1.msra.mxu0 %v1381
    %1843 = vmatprep.subr.mxu0 %v1380
    %1844 = vmatpush1.msra.mxu0 %v1379
    %1845 = vmatprep.subr.mxu0 %v1378
    %1846 = vmatpush1.msra.mxu0 %v1377
    %1847 = vmatprep.subr.mxu0 %v1376
    %1848 = vmatpush1.msra.mxu0 %v1375
    %1849 = vmatprep.subr.mxu0 %v1374
    %1850 = vmatpush1.msra.mxu0 %v1373
    %1851 = vmatprep.subr.mxu0 %v1372
    %1852 = vmatpush1.msra.mxu0 %v1371
    %1853 = vmatprep.subr.mxu0 %v1370
    %1854 = vmatpush1.msra.mxu0 %v1369
    %1855 = vmatprep.subr.mxu0 0.0
    %1856 = vmatpush2.msra.mxu0 0.0
    %1857 = vmatprep.subr.mxu0 0.0
    %1858 = vmatpush2.msra.mxu0 0.0
    %1859 = vmatprep.subr.mxu0 0.0
    %1860 = vmatpush2.msra.mxu0 0.0
    %1861 = vmatprep.subr.mxu0 0.0
    %1862 = vmatpush2.msra.mxu0 0.0
    %1863 = vmatprep.subr.mxu0 0.0
    %1864 = vmatpush2.msra.mxu0 0.0
    %1865 = vmatprep.subr.mxu0 0.0
    %1866 = vmatpush2.msra.mxu0 0.0
    %1867 = vmatprep.subr.mxu0 0.0
    %1868 = vmatpush2.msra.mxu0 0.0
    %1869 = vmatprep.subr.mxu0 0.0
    %1870 = vmatpush2.msra.mxu0 0.0
    %1871 = vmatprep.subr.mxu0 0.0
    %1872 = vmatpush2.msra.mxu0 0.0
    %1873 = vmatprep.subr.mxu0 0.0
    %1874 = vmatpush2.msra.mxu0 0.0
    %1875 = vmatprep.subr.mxu0 0.0
    %1876 = vmatpush2.msra.mxu0 0.0
    %1877 = vmatprep.subr.mxu0 0.0
    %1878 = vmatpush2.msra.mxu0 0.0
    %1879 = vmatprep.subr.mxu0 0.0
    %1880 = vmatpush2.msra.mxu0 0.0
    %1881 = vmatprep.subr.mxu0 0.0
    %1882 = vmatpush2.msra.mxu0 0.0
    %1883 = vmatprep.subr.mxu0 0.0
    %1884 = vmatpush2.msra.mxu0 0.0
    %1885 = vmatprep.subr.mxu0 0.0
    %1886 = vmatpush2.msra.mxu0 0.0
    %1887 = vmatprep.mubr.f32.mxu0 0.0
    %1888 = vmatmul.mubr.f32.gmra.mxu0 %v76
    %v1889 = vpop.f32.mrf.mxu0
    %v1890 = vadd.f32 %v1777, %v1889
    %v1891 = vpop.f32.mrf.mxu0
    %v1892 = vadd.f32 %v1779, %v1891
    %1893 = vmatprep.mubr.f32.mxu0 0.0
    %1894 = vmatmul.mubr.f32.gmra.mxu0 %v77
    %v1895 = vpop.f32.mrf.mxu0
    %v1896 = vadd.f32 %v1783, %v1895
    %v1897 = vpop.f32.mrf.mxu0
    %v1898 = vadd.f32 %v1785, %v1897
    %1899 = vmatprep.mubr.f32.mxu0 0.0
    %1900 = vmatmul.mubr.f32.gmra.mxu0 %v78
    %v1901 = vpop.f32.mrf.mxu0
    %v1902 = vadd.f32 %v1789, %v1901
    %v1903 = vpop.f32.mrf.mxu0
    %v1904 = vadd.f32 %v1791, %v1903
    %1905 = vmatprep.mubr.f32.mxu0 0.0
    %1906 = vmatmul.mubr.f32.gmra.mxu0 %v79
    %v1907 = vpop.f32.mrf.mxu0
    %v1908 = vadd.f32 %v1795, %v1907
    %v1909 = vpop.f32.mrf.mxu0
    %v1910 = vadd.f32 %v1797, %v1909
    %1911 = vmatprep.mubr.f32.mxu0 0.0
    %1912 = vmatmul.mubr.f32.gmra.mxu0 %v80
    %v1913 = vpop.f32.mrf.mxu0
    %v1914 = vadd.f32 %v1801, %v1913
    %v1915 = vpop.f32.mrf.mxu0
    %v1916 = vadd.f32 %v1803, %v1915
    %1917 = vmatprep.mubr.f32.mxu0 0.0
    %1918 = vmatmul.mubr.f32.gmra.mxu0 %v81
    %v1919 = vpop.f32.mrf.mxu0
    %v1920 = vadd.f32 %v1807, %v1919
    %v1921 = vpop.f32.mrf.mxu0
    %v1922 = vadd.f32 %v1809, %v1921
    %1923 = vmatprep.mubr.f32.mxu0 0.0
    %1924 = vmatmul.mubr.f32.gmra.mxu0 %v82
    %v1925 = vpop.f32.mrf.mxu0
    %v1926 = vadd.f32 %v1813, %v1925
    %v1927 = vpop.f32.mrf.mxu0
    %v1928 = vadd.f32 %v1815, %v1927
    %1929 = vmatprep.mubr.f32.mxu0 0.0
    %1930 = vmatmul.mubr.f32.gmra.mxu0 %v83
    %v1931 = vpop.f32.mrf.mxu0
    %v1932 = vadd.f32 %v1819, %v1931
    %v1933 = vpop.f32.mrf.mxu0
    %v1934 = vadd.f32 %v1821, %v1933
    %1935 = vdwg.mxu0
    %v1936 = vadd.f32 %v1890, %v758
    %v1937 = vadd.f32 %v1892, %v758
    %v1938 = vadd.f32 %v1896, %v762
    %v1939 = vadd.f32 %v1898, %v762
    %v1940 = vadd.f32 %v1902, %v766
    %v1941 = vadd.f32 %v1904, %v766
    %v1942 = vadd.f32 %v1908, %v770
    %v1943 = vadd.f32 %v1910, %v770
    %v1944 = vadd.f32 %v1914, %v775
    %v1945 = vadd.f32 %v1916, %v775
    %v1946 = vadd.f32 %v1920, %v780
    %v1947 = vadd.f32 %v1922, %v780
    %v1948 = vadd.f32 %v1926, %v785
    %v1949 = vadd.f32 %v1928, %v785
    %v1950 = vadd.f32 %v1932, %v790
    %v1951 = vadd.f32 %v1934, %v790
    %v1952 = vadd.f32 %v1936, %v1938
    %v1953 = vadd.f32 %v1952, %v1940
    %v1954 = vadd.f32 %v1953, %v1942
    %v1955 = vadd.f32 %v1954, %v1944
    %v1956 = vadd.f32 %v1955, %v1946
    %v1957 = vadd.f32 %v1956, %v1948
    %v1958 = vadd.f32 %v1957, %v1950
    %v1959 = vrot.slane %v1958, 4
    %v1960 = vadd.f32 %v1958, %v1959
    %v1961 = vrot.slane %v1960, 2
    %v1962 = vadd.f32 %v1960, %v1961
    %v1963 = vrot.slane %v1962, 1
    %v1964 = vadd.f32 %v1962, %v1963
    %v1965 = vadd.f32 %v1937, %v1939
    %v1966 = vadd.f32 %v1965, %v1941
    %v1967 = vadd.f32 %v1966, %v1943
    %v1968 = vadd.f32 %v1967, %v1945
    %v1969 = vadd.f32 %v1968, %v1947
    %v1970 = vadd.f32 %v1969, %v1949
    %v1971 = vadd.f32 %v1970, %v1951
    %v1972 = vrot.slane %v1971, 4
    %v1973 = vadd.f32 %v1971, %v1972
    %v1974 = vrot.slane %v1973, 2
    %v1975 = vadd.f32 %v1973, %v1974
    %v1976 = vrot.slane %v1975, 1
    %v1977 = vadd.f32 %v1975, %v1976
    %v1978 = vmul.f32 %v1964, %v834
    %v1979 = vmul.f32 %v1977, %v834
    %v1980 = vmul.f32 %v1936, %v1936
    %v1981 = vmul.f32 %v1937, %v1937
    %v1982 = vmul.f32 %v1938, %v1938
    %v1983 = vmul.f32 %v1939, %v1939
    %v1984 = vmul.f32 %v1940, %v1940
    %v1985 = vmul.f32 %v1941, %v1941
    %v1986 = vmul.f32 %v1942, %v1942
    %v1987 = vmul.f32 %v1943, %v1943
    %v1988 = vmul.f32 %v1944, %v1944
    %v1989 = vmul.f32 %v1945, %v1945
    %v1990 = vmul.f32 %v1946, %v1946
    %v1991 = vmul.f32 %v1947, %v1947
    %v1992 = vmul.f32 %v1948, %v1948
    %v1993 = vmul.f32 %v1949, %v1949
    %v1994 = vmul.f32 %v1950, %v1950
    %v1995 = vmul.f32 %v1951, %v1951
    %v1996 = vadd.f32 %v1980, %v1982
    %v1997 = vadd.f32 %v1996, %v1984
    %v1998 = vadd.f32 %v1997, %v1986
    %v1999 = vadd.f32 %v1998, %v1988
    %v2000 = vadd.f32 %v1999, %v1990
    %v2001 = vadd.f32 %v2000, %v1992
    %v2002 = vadd.f32 %v2001, %v1994
    %v2003 = vrot.slane %v2002, 4
    %v2004 = vadd.f32 %v2002, %v2003
    %v2005 = vrot.slane %v2004, 2
    %v2006 = vadd.f32 %v2004, %v2005
    %v2007 = vrot.slane %v2006, 1
    %v2008 = vadd.f32 %v2006, %v2007
    %v2009 = vadd.f32 %v1981, %v1983
    %v2010 = vadd.f32 %v2009, %v1985
    %v2011 = vadd.f32 %v2010, %v1987
    %v2012 = vadd.f32 %v2011, %v1989
    %v2013 = vadd.f32 %v2012, %v1991
    %v2014 = vadd.f32 %v2013, %v1993
    %v2015 = vadd.f32 %v2014, %v1995
    %v2016 = vrot.slane %v2015, 4
    %v2017 = vadd.f32 %v2015, %v2016
    %v2018 = vrot.slane %v2017, 2
    %v2019 = vadd.f32 %v2017, %v2018
    %v2020 = vrot.slane %v2019, 1
    %v2021 = vadd.f32 %v2019, %v2020
    %v2022 = vmul.f32 %v2008, %v834
    %v2023 = vmul.f32 %v2021, %v834
    %v2024 = vmul.f32 %v1978, %v1978
    %v2025 = vmul.f32 %v1979, %v1979
    %v2026 = vsub.f32 %v2022, %v2024
    %v2027 = vsub.f32 %v2023, %v2025
    %v2028 = vmax.f32 %v2026, 0.0
    %v2029 = vmax.f32 %v2027, 0.0
    %v2030 = vsub.f32 %v1936, %v1978
    %v2031 = vsub.f32 %v1937, %v1979
    %v2032 = vsub.f32 %v1938, %v1978
    %v2033 = vsub.f32 %v1939, %v1979
    %v2034 = vsub.f32 %v1940, %v1978
    %v2035 = vsub.f32 %v1941, %v1979
    %v2036 = vsub.f32 %v1942, %v1978
    %v2037 = vsub.f32 %v1943, %v1979
    %v2038 = vsub.f32 %v1944, %v1978
    %v2039 = vsub.f32 %v1945, %v1979
    %v2040 = vsub.f32 %v1946, %v1978
    %v2041 = vsub.f32 %v1947, %v1979
    %v2042 = vsub.f32 %v1948, %v1978
    %v2043 = vsub.f32 %v1949, %v1979
    %v2044 = vsub.f32 %v1950, %v1978
    %v2045 = vsub.f32 %v1951, %v1979
    %v2046 = vadd.f32 %v2028, 1e-05
    %v2047 = vadd.f32 %v2029, 1e-05
    %v2048 = vrsqrt.pop %v2046
    %v2049 = vrsqrt.pop %v2047
    %v2050 = vmul.f32 %v2030, %v2048
    %v2051 = vmul.f32 %v2031, %v2049
    %v2052 = vmul.f32 %v2032, %v2048
    %v2053 = vmul.f32 %v2033, %v2049
    %v2054 = vmul.f32 %v2034, %v2048
    %v2055 = vmul.f32 %v2035, %v2049
    %v2056 = vmul.f32 %v2036, %v2048
    %v2057 = vmul.f32 %v2037, %v2049
    %v2058 = vmul.f32 %v2038, %v2048
    %v2059 = vmul.f32 %v2039, %v2049
    %v2060 = vmul.f32 %v2040, %v2048
    %v2061 = vmul.f32 %v2041, %v2049
    %v2062 = vmul.f32 %v2042, %v2048
    %v2063 = vmul.f32 %v2043, %v2049
    %v2064 = vmul.f32 %v2044, %v2048
    %v2065 = vmul.f32 %v2045, %v2049
    %v2066 = vmul.f32 %v2050, %v925
    %v2067 = vmul.f32 %v2051, %v925
    %v2068 = vmul.f32 %v2052, %v929
    %v2069 = vmul.f32 %v2053, %v929
    %v2070 = vmul.f32 %v2054, %v933
    %v2071 = vmul.f32 %v2055, %v933
    %v2072 = vmul.f32 %v2056, %v937
    %v2073 = vmul.f32 %v2057, %v937
    %v2074 = vmul.f32 %v2058, %v941
    %v2075 = vmul.f32 %v2059, %v941
    %v2076 = vmul.f32 %v2060, %v945
    %v2077 = vmul.f32 %v2061, %v945
    %v2078 = vmul.f32 %v2062, %v949
    %v2079 = vmul.f32 %v2063, %v949
    %v2080 = vmul.f32 %v2064, %v953
    %v2081 = vmul.f32 %v2065, %v953
    %v2082 = vadd.f32 %v2066, %v973
    %v2083 = vadd.f32 %v2067, %v973
    %v2084 = vadd.f32 %v2068, %v977
    %v2085 = vadd.f32 %v2069, %v977
    %v2086 = vadd.f32 %v2070, %v981
    %v2087 = vadd.f32 %v2071, %v981
    %v2088 = vadd.f32 %v2072, %v985
    %v2089 = vadd.f32 %v2073, %v985
    %v2090 = vadd.f32 %v2074, %v989
    %v2091 = vadd.f32 %v2075, %v989
    %v2092 = vadd.f32 %v2076, %v993
    %v2093 = vadd.f32 %v2077, %v993
    %v2094 = vadd.f32 %v2078, %v997
    %v2095 = vadd.f32 %v2079, %v997
    %v2096 = vadd.f32 %v2080, %v1001
    %v2097 = vadd.f32 %v2081, %v1001
    %v2098 = vmax.f32 %v2082, 0.0
    %v2099 = vmax.f32 %v2083, 0.0
    %v2100 = vmax.f32 %v2084, 0.0
    %v2101 = vmax.f32 %v2085, 0.0
    %v2102 = vmax.f32 %v2086, 0.0
    %v2103 = vmax.f32 %v2087, 0.0
    %v2104 = vmax.f32 %v2088, 0.0
    %v2105 = vmax.f32 %v2089, 0.0
    %v2106 = vmax.f32 %v2090, 0.0
    %v2107 = vmax.f32 %v2091, 0.0
    %v2108 = vmax.f32 %v2092, 0.0
    %v2109 = vmax.f32 %v2093, 0.0
    %v2110 = vmax.f32 %v2094, 0.0
    %v2111 = vmax.f32 %v2095, 0.0
    %v2112 = vmax.f32 %v2096, 0.0
    %v2113 = vmax.f32 %v2097, 0.0
    %2114 = vmatprep.subr.mxu0 0.0
    %2115 = vmatpush1.msra.mxu0 0.0
    %2116 = vmatprep.subr.mxu0 0.0
    %2117 = vmatpush1.msra.mxu0 0.0
    %2118 = vmatprep.subr.mxu0 0.0
    %2119 = vmatpush1.msra.mxu0 0.0
    %2120 = vmatprep.subr.mxu0 0.0
    %2121 = vmatpush1.msra.mxu0 0.0
    %2122 = vmatprep.subr.mxu0 0.0
    %2123 = vmatpush1.msra.mxu0 0.0
    %2124 = vmatprep.subr.mxu0 0.0
    %2125 = vmatpush1.msra.mxu0 0.0
    %2126 = vmatprep.subr.mxu0 0.0
    %2127 = vmatpush1.msra.mxu0 0.0
    %2128 = vmatprep.subr.mxu0 0.0
    %2129 = vmatpush1.msra.mxu0 0.0
    %2130 = vmatprep.subr.mxu0 %v2113
    %2131 = vmatpush1.msra.mxu0 %v2112
    %2132 = vmatprep.subr.mxu0 %v2111
    %2133 = vmatpush1.msra.mxu0 %v2110
    %2134 = vmatprep.subr.mxu0 %v2109
    %2135 = vmatpush1.msra.mxu0 %v2108
    %2136 = vmatprep.subr.mxu0 %v2107
    %2137 = vmatpush1.msra.mxu0 %v2106
    %2138 = vmatprep.subr.mxu0 %v2105
    %2139 = vmatpush1.msra.mxu0 %v2104
    %2140 = vmatprep.subr.mxu0 %v2103
    %2141 = vmatpush1.msra.mxu0 %v2102
    %2142 = vmatprep.subr.mxu0 %v2101
    %2143 = vmatpush1.msra.mxu0 %v2100
    %2144 = vmatprep.subr.mxu0 %v2099
    %2145 = vmatpush1.msra.mxu0 %v2098
    %2146 = vmatprep.subr.mxu0 0.0
    %2147 = vmatpush2.msra.mxu0 0.0
    %2148 = vmatprep.subr.mxu0 0.0
    %2149 = vmatpush2.msra.mxu0 0.0
    %2150 = vmatprep.subr.mxu0 0.0
    %2151 = vmatpush2.msra.mxu0 0.0
    %2152 = vmatprep.subr.mxu0 0.0
    %2153 = vmatpush2.msra.mxu0 0.0
    %2154 = vmatprep.subr.mxu0 0.0
    %2155 = vmatpush2.msra.mxu0 0.0
    %2156 = vmatprep.subr.mxu0 0.0
    %2157 = vmatpush2.msra.mxu0 0.0
    %2158 = vmatprep.subr.mxu0 0.0
    %2159 = vmatpush2.msra.mxu0 0.0
    %2160 = vmatprep.subr.mxu0 0.0
    %2161 = vmatpush2.msra.mxu0 0.0
    %2162 = vmatprep.subr.mxu0 0.0
    %2163 = vmatpush2.msra.mxu0 0.0
    %2164 = vmatprep.subr.mxu0 0.0
    %2165 = vmatpush2.msra.mxu0 0.0
    %2166 = vmatprep.subr.mxu0 0.0
    %2167 = vmatpush2.msra.mxu0 0.0
    %2168 = vmatprep.subr.mxu0 0.0
    %2169 = vmatpush2.msra.mxu0 0.0
    %2170 = vmatprep.subr.mxu0 0.0
    %2171 = vmatpush2.msra.mxu0 0.0
    %2172 = vmatprep.subr.mxu0 0.0
    %2173 = vmatpush2.msra.mxu0 0.0
    %2174 = vmatprep.subr.mxu0 0.0
    %2175 = vmatpush2.msra.mxu0 0.0
    %2176 = vmatprep.subr.mxu0 0.0
    %2177 = vmatpush2.msra.mxu0 0.0
    %2178 = vmatprep.mubr.f32.mxu0 0.0
    %2179 = vmatmul.mubr.f32.gmra.mxu0 %v1036
    %v2180 = vpop.f32.mrf.mxu0
    %v2181 = vadd.f32 0.0, %v2180
    %v2182 = vpop.f32.mrf.mxu0
    %v2183 = vadd.f32 0.0, %v2182
    %2184 = vmatprep.mubr.f32.mxu0 0.0
    %2185 = vmatmul.mubr.f32.gmra.mxu0 %v1039
    %v2186 = vpop.f32.mrf.mxu0
    %v2187 = vadd.f32 0.0, %v2186
    %v2188 = vpop.f32.mrf.mxu0
    %v2189 = vadd.f32 0.0, %v2188
    %2190 = vmatprep.mubr.f32.mxu0 0.0
    %2191 = vmatmul.mubr.f32.gmra.mxu0 %v1042
    %v2192 = vpop.f32.mrf.mxu0
    %v2193 = vadd.f32 0.0, %v2192
    %v2194 = vpop.f32.mrf.mxu0
    %v2195 = vadd.f32 0.0, %v2194
    %2196 = vmatprep.mubr.f32.mxu0 0.0
    %2197 = vmatmul.mubr.f32.gmra.mxu0 %v1045
    %v2198 = vpop.f32.mrf.mxu0
    %v2199 = vadd.f32 0.0, %v2198
    %v2200 = vpop.f32.mrf.mxu0
    %v2201 = vadd.f32 0.0, %v2200
    %2202 = vdwg.mxu0
    %v2203 = vadd.f32 %v2181, %v2187
    %v2204 = vadd.f32 %v2203, %v2193
    %v2205 = vadd.f32 %v2204, %v2199
    %v2206 = vrot.slane %v2205, 4
    %v2207 = vadd.f32 %v2205, %v2206
    %v2208 = vrot.slane %v2207, 2
    %v2209 = vadd.f32 %v2207, %v2208
    %v2210 = vrot.slane %v2209, 1
    %v2211 = vadd.f32 %v2209, %v2210
    %v2212 = vadd.f32 %v2183, %v2189
    %v2213 = vadd.f32 %v2212, %v2195
    %v2214 = vadd.f32 %v2213, %v2201
    %v2215 = vrot.slane %v2214, 4
    %v2216 = vadd.f32 %v2214, %v2215
    %v2217 = vrot.slane %v2216, 2
    %v2218 = vadd.f32 %v2216, %v2217
    %v2219 = vrot.slane %v2218, 1
    %v2220 = vadd.f32 %v2218, %v2219
    %v2221 = vmul.f32 %v2211, %v250
    %v2222 = vmul.f32 %v2220, %v250
    %v2223 = vmul.f32 %v2181, %v2181
    %v2224 = vmul.f32 %v2183, %v2183
    %v2225 = vmul.f32 %v2187, %v2187
    %v2226 = vmul.f32 %v2189, %v2189
    %v2227 = vmul.f32 %v2193, %v2193
    %v2228 = vmul.f32 %v2195, %v2195
    %v2229 = vmul.f32 %v2199, %v2199
    %v2230 = vmul.f32 %v2201, %v2201
    %v2231 = vadd.f32 %v2223, %v2225
    %v2232 = vadd.f32 %v2231, %v2227
    %v2233 = vadd.f32 %v2232, %v2229
    %v2234 = vrot.slane %v2233, 4
    %v2235 = vadd.f32 %v2233, %v2234
    %v2236 = vrot.slane %v2235, 2
    %v2237 = vadd.f32 %v2235, %v2236
    %v2238 = vrot.slane %v2237, 1
    %v2239 = vadd.f32 %v2237, %v2238
    %v2240 = vadd.f32 %v2224, %v2226
    %v2241 = vadd.f32 %v2240, %v2228
    %v2242 = vadd.f32 %v2241, %v2230
    %v2243 = vrot.slane %v2242, 4
    %v2244 = vadd.f32 %v2242, %v2243
    %v2245 = vrot.slane %v2244, 2
    %v2246 = vadd.f32 %v2244, %v2245
    %v2247 = vrot.slane %v2246, 1
    %v2248 = vadd.f32 %v2246, %v2247
    %v2249 = vmul.f32 %v2239, %v250
    %v2250 = vmul.f32 %v2248, %v250
    %v2251 = vmul.f32 %v2221, %v2221
    %v2252 = vmul.f32 %v2222, %v2222
    %v2253 = vsub.f32 %v2249, %v2251
    %v2254 = vsub.f32 %v2250, %v2252
    %v2255 = vmax.f32 %v2253, 0.0
    %v2256 = vmax.f32 %v2254, 0.0
    %v2257 = vsub.f32 %v2181, %v2221
    %v2258 = vsub.f32 %v2183, %v2222
    %v2259 = vsub.f32 %v2187, %v2221
    %v2260 = vsub.f32 %v2189, %v2222
    %v2261 = vsub.f32 %v2193, %v2221
    %v2262 = vsub.f32 %v2195, %v2222
    %v2263 = vsub.f32 %v2199, %v2221
    %v2264 = vsub.f32 %v2201, %v2222
    %v2265 = vadd.f32 %v2255, 1e-05
    %v2266 = vadd.f32 %v2256, 1e-05
    %v2267 = vrsqrt.pop %v2265
    %v2268 = vrsqrt.pop %v2266
    %v2269 = vmul.f32 %v2257, %v2267
    %v2270 = vmul.f32 %v2258, %v2268
    %v2271 = vmul.f32 %v2259, %v2267
    %v2272 = vmul.f32 %v2260, %v2268
    %v2273 = vmul.f32 %v2261, %v2267
    %v2274 = vmul.f32 %v2262, %v2268
    %v2275 = vmul.f32 %v2263, %v2267
    %v2276 = vmul.f32 %v2264, %v2268
    %v2277 = vmul.f32 %v2269, %v1212
    %v2278 = vmul.f32 %v2270, %v1212
    %v2279 = vmul.f32 %v2271, %v1216
    %v2280 = vmul.f32 %v2272, %v1216
    %v2281 = vmul.f32 %v2273, %v1220
    %v2282 = vmul.f32 %v2274, %v1220
    %v2283 = vmul.f32 %v2275, %v1224
    %v2284 = vmul.f32 %v2276, %v1224
    %v2285 = vadd.f32 %v2277, %v1236
    %v2286 = vadd.f32 %v2278, %v1236
    %v2287 = vadd.f32 %v2279, %v1240
    %v2288 = vadd.f32 %v2280, %v1240
    %v2289 = vadd.f32 %v2281, %v1244
    %v2290 = vadd.f32 %v2282, %v1244
    %v2291 = vadd.f32 %v2283, %v1248
    %v2292 = vadd.f32 %v2284, %v1248
    %v2293 = vmax.f32 %v2285, 0.0
    %v2294 = vmax.f32 %v2286, 0.0
    %v2295 = vmax.f32 %v2287, 0.0
    %v2296 = vmax.f32 %v2288, 0.0
    %v2297 = vmax.f32 %v2289, 0.0
    %v2298 = vmax.f32 %v2290, 0.0
    %v2299 = vmax.f32 %v2291, 0.0
    %v2300 = vmax.f32 %v2292, 0.0
    %2301 = vmatprep.subr.mxu0 0.0
    %2302 = vmatpush1.msra.mxu0 0.0
    %2303 = vmatprep.subr.mxu0 0.0
    %2304 = vmatpush1.msra.mxu0 0.0
    %2305 = vmatprep.subr.mxu0 0.0
    %2306 = vmatpush1.msra.mxu0 0.0
    %2307 = vmatprep.subr.mxu0 0.0
    %2308 = vmatpush1.msra.mxu0 0.0
    %2309 = vmatprep.subr.mxu0 0.0
    %2310 = vmatpush1.msra.mxu0 0.0
    %2311 = vmatprep.subr.mxu0 0.0
    %2312 = vmatpush1.msra.mxu0 0.0
    %2313 = vmatprep.subr.mxu0 0.0
    %2314 = vmatpush1.msra.mxu0 0.0
    %2315 = vmatprep.subr.mxu0 0.0
    %2316 = vmatpush1.msra.mxu0 0.0
    %2317 = vmatprep.subr.mxu0 0.0
    %2318 = vmatpush1.msra.mxu0 0.0
    %2319 = vmatprep.subr.mxu0 0.0
    %2320 = vmatpush1.msra.mxu0 0.0
    %2321 = vmatprep.subr.mxu0 0.0
    %2322 = vmatpush1.msra.mxu0 0.0
    %2323 = vmatprep.subr.mxu0 0.0
    %2324 = vmatpush1.msra.mxu0 0.0
    %2325 = vmatprep.subr.mxu0 %v2300
    %2326 = vmatpush1.msra.mxu0 %v2299
    %2327 = vmatprep.subr.mxu0 %v2298
    %2328 = vmatpush1.msra.mxu0 %v2297
    %2329 = vmatprep.subr.mxu0 %v2296
    %2330 = vmatpush1.msra.mxu0 %v2295
    %2331 = vmatprep.subr.mxu0 %v2294
    %2332 = vmatpush1.msra.mxu0 %v2293
    %2333 = vmatprep.subr.mxu0 0.0
    %2334 = vmatpush2.msra.mxu0 0.0
    %2335 = vmatprep.subr.mxu0 0.0
    %2336 = vmatpush2.msra.mxu0 0.0
    %2337 = vmatprep.subr.mxu0 0.0
    %2338 = vmatpush2.msra.mxu0 0.0
    %2339 = vmatprep.subr.mxu0 0.0
    %2340 = vmatpush2.msra.mxu0 0.0
    %2341 = vmatprep.subr.mxu0 0.0
    %2342 = vmatpush2.msra.mxu0 0.0
    %2343 = vmatprep.subr.mxu0 0.0
    %2344 = vmatpush2.msra.mxu0 0.0
    %2345 = vmatprep.subr.mxu0 0.0
    %2346 = vmatpush2.msra.mxu0 0.0
    %2347 = vmatprep.subr.mxu0 0.0
    %2348 = vmatpush2.msra.mxu0 0.0
    %2349 = vmatprep.subr.mxu0 0.0
    %2350 = vmatpush2.msra.mxu0 0.0
    %2351 = vmatprep.subr.mxu0 0.0
    %2352 = vmatpush2.msra.mxu0 0.0
    %2353 = vmatprep.subr.mxu0 0.0
    %2354 = vmatpush2.msra.mxu0 0.0
    %2355 = vmatprep.subr.mxu0 0.0
    %2356 = vmatpush2.msra.mxu0 0.0
    %2357 = vmatprep.subr.mxu0 0.0
    %2358 = vmatpush2.msra.mxu0 0.0
    %2359 = vmatprep.subr.mxu0 0.0
    %2360 = vmatpush2.msra.mxu0 0.0
    %2361 = vmatprep.subr.mxu0 0.0
    %2362 = vmatpush2.msra.mxu0 0.0
    %2363 = vmatprep.subr.mxu0 0.0
    %2364 = vmatpush2.msra.mxu0 0.0
    %2365 = vmatprep.mubr.f32.mxu0 0.0
    %2366 = vmatmul.mubr.f32.gmra.mxu0 %v1272
    %v2367 = vpop.f32.mrf.mxu0
    %v2368 = vadd.f32 %v1269, %v2367
    %v2369 = vpop.f32.mrf.mxu0
    %v2370 = vadd.f32 %v1269, %v2369
    %2371 = vdwg.mxu0
    %v2374 = vcombine.low %v2368, %v2370
    %v2376 = vunpack.c.l.s4 1966171168
    %v2377 = vunpack.c.0.s8 %v2376
    %v2378 = vlaneseq
    %v2379 = vshrl.u32 %v2378, 7
    %v2380 = vsub.s32 %v2377, %v2379
    %v2381 = vrot.slane %v2374, %v2380
    %v2383 = vunpack.c.l.s4 1966171168
    %v2384 = vunpack.c.0.s8 %v2383
    %v2385 = vlaneseq
    %v2386 = vshrl.u32 %v2385, 7
    %v2387 = vsub.s32 %v2384, %v2386
    %v2388 = vrot.slane %v2381, %v2387
    %s2390 = scalar_lea.vmem [#allocation5], 2
    %2391 = vst.msk [vmem:[%s2390] sm:$0x3] %vm1366, %v2388
    // Predicated region
    $region42: #{tpu_custom_call.1} parent=1 // pred_check
      _
    $region43: #{tpu_custom_call.1} parent=1 // pred_check_branch
      %2393 = sbr.rel (0) target = $region45
    $region44: #{tpu_custom_call.1} parent=1 // pred_region
      %s2395 = ssub.s32 64, 64
      %2396 = vsyncadd [#allocation4], %s2395
      %s2397 = sshll.u32 [#allocation5], 4
      %s2398 = int_to_ptr.vmem [resolvable:$true] %s2397
      %2403 = dma.vmem_to_hbm [thread:$0]  %s2398, 64, %s9, [#allocation4], 32, 32, 2
    $region45: #{tpu_custom_call.1} parent=1 // pred_fallthru
      _
    // Predicated region
    $region46: #{tpu_custom_call.1} parent=1 // pred_check
      _
    $region47: #{tpu_custom_call.1} parent=1 // pred_check_branch
      %2405 = sbr.rel (0) target = $region49
    $region48: #{tpu_custom_call.1} parent=1 // pred_region
      %2406 = dma.done [#allocation4], 64
    $region49: #{tpu_custom_call.1} parent=1 // pred_fallthru
      _
    %2407 = vsyncpa [#allocation3], 1
    %2408 = vsyncpa [#allocation4], 1

</llo_original>
